<compile_context>
chip_gen: v5e
topology: v5e:2x2
jax: 0.10.0
libtpu: 0.0.40
codegen_flags: <defaults>
</compile_context>

<pallas_src>
import jax
import jax.numpy as jnp
from jax.experimental import pallas as pl
from jax.experimental.pallas import tpu as pltpu


def _tpu_limits():
    """(physical VMEM bytes per core, TensorCore count); safe defaults."""
    vmem = 64 << 20          # conservative default = v7x per-core VMEM
    cores = 0                # 0 == unknown
    try:
        info = pltpu.get_tpu_info()
    except Exception:
        return vmem, cores
    try:
        v = int(getattr(info, "vmem_capacity_bytes"))
        if v > 0:
            vmem = v
    except Exception:
        pass
    for name in ("num_cores", "core_count", "tensorcore_count",
                 "num_tensorcores", "tensor_cores"):
        try:
            c = int(getattr(info, name))
            if c > 0:
                cores = c
                break
        except Exception:
            pass
    return vmem, min(cores, 2)   # current TPUs expose at most 2 TCs per device


def _tiled_spec(block_shape, index_map, n_buffers):
    """BlockSpec with optional deeper pipelining; falls back if unsupported."""
    if n_buffers > 2:
        try:
            return pl.BlockSpec(block_shape, index_map,
                                pipeline_mode=pl.Buffered(n_buffers))
        except Exception:
            pass
    return pl.BlockSpec(block_shape, index_map)


def _run_loss_kernel(mel_out3, mel_post3, mel_tgt3,
                     gate_out2, gate_tgt2, guide3, align3,
                     gst_pred2, gst_tgt2, *,
                     guide_pretransposed=False, conservative=False):
    """Returns raw SUMS: (mel_sq_sum, gate_bce_sum, atten_abs_sum, gst_l1_sum).

    guide_pretransposed=False: guide3 is the UN-transposed guide (B, GH>=h, GW>=w);
      the kernel slices it and transposes the alignment block on-chip.
    guide_pretransposed=True : guide3 is the exact transposed guide (B, w, h)
      (previously validated layout; used by the conservative fallback).
    """
    B, n_mel, T = mel_out3.shape
    _, w, h = align3.shape
    _, GH, GW = guide3.shape
    Tg = gate_out2.shape[-1]
    G = gst_pred2.shape[-1]
    f32 = jnp.float32

    phys_vmem, n_cores = _tpu_limits()
    if conservative:
        n_cores = 0
    vmem_cap = max(int(phys_vmem * 0.8), 16 << 20)   # ~51 MiB v7x, ~102 MiB v5e/v6e

    # ---- batch split across TensorCores (engages only on a real megacore) ---
    core_parallel = False
    if n_cores >= 2 and B >= n_cores and B % n_cores == 0:
        n_splits, core_parallel = n_cores, True
    elif B >= 2 and B % 2 == 0 and n_cores != 1:
        n_splits = 2          # unknown HW: harmless serial split (prev. behavior)
    else:
        n_splits = 1
    spb = B // n_splits

    # ---- batch-block size Bb: largest divisor of spb whose buffers fit VMEM --
    def nbytes(x):
        return x.size * jnp.dtype(x.dtype).itemsize

    per_batch_tile = ((nbytes(mel_out3) + nbytes(mel_post3) + nbytes(mel_tgt3)
                       + nbytes(guide3) + nbytes(align3)) // B)
    resident = (nbytes(gate_out2) + nbytes(gate_tgt2)
                + nbytes(gst_pred2) + nbytes(gst_tgt2))
    accum = 4 * (n_mel * T + h * w + Tg + G)
    overhead = 2 * resident + accum + (4 << 20)      # residents, accs, Mosaic scratch
    tile_budget = max(vmem_cap - overhead, 4 << 20)

    if conservative:
        Bb, n_buffers = 1, 2
    else:
        Bb = 1
        for cand in (8, 4, 2, 1):
            if spb % cand == 0 and (cand == 1
                                    or 2 * cand * per_batch_tile <= tile_budget):
                Bb = cand
                break
        steps_tmp = spb // Bb
        n_buffers = 3 if (steps_tmp >= 3
                          and 3 * Bb * per_batch_tile <= tile_budget) else 2
    steps = spb // Bb

    est = n_buffers * Bb * per_batch_tile + overhead
    vmem_limit = int(min(max(est, 16 << 20), vmem_cap))

    bmap3 = lambda i, j: (i * steps + j, 0, 0)
    const2 = lambda i, j: (0, 0)

    def kernel(mel_out_ref, mel_post_ref, mel_tgt_ref,
               gate_out_ref, gate_tgt_ref,
               guide_ref, align_ref,
               gst_pred_ref, gst_tgt_ref,
               out_ref,
               acc_mel, acc_att, acc_gate, acc_gst):
        i = pl.program_id(0)
        j = pl.program_id(1)
        nj = pl.num_programs(1)

        @pl.when(j == 0)
        def _init():
            acc_mel[...] = jnp.zeros_like(acc_mel)
            acc_att[...] = jnp.zeros_like(acc_att)
            acc_gate[...] = jnp.zeros_like(acc_gate)
            acc_gst[...] = jnp.zeros_like(acc_gst)

        # ---- mel partial: only the batch-block axis is reduced per step -----
        mo = mel_out_ref[...].astype(f32)            # (Bb, n_mel, T)
        mp = mel_post_ref[...].astype(f32)
        mt = mel_tgt_ref[...].astype(f32)
        d1 = mo - mt
        d2 = mp - mt
        acc_mel[...] += jnp.sum(d1 * d1 + d2 * d2, axis=0)      # (n_mel, T)

        # ---- guided-attention partial ---------------------------------------
        a = align_ref[...].astype(f32)               # (Bb, w, h)
        if guide_pretransposed:
            g = guide_ref[...].astype(f32)           # (Bb, w, h)
            prod = jnp.abs(g * a)                    # (Bb, w, h)
        else:
            # on-chip layout swap (XLU, hidden under DMA) + VMEM slice of the
            # (possibly padded) un-transposed guide tile
            a_t = jnp.transpose(a, (0, 2, 1))        # (Bb, h, w)
            g = guide_ref[:, :h, :w].astype(f32)     # (Bb, h, w)
            prod = jnp.abs(a_t * g)                  # (Bb, h, w)
        acc_att[...] += jnp.sum(prod, axis=0)

        # ---- tiny tensors (gate BCE-with-logits, GST L1): computed once -----
        @pl.when((i == 0) & (j == 0))
        def _small():
            x = gate_out_ref[...].astype(f32)
            y = gate_tgt_ref[...].astype(f32)
            # stable BCE-with-logits: max(x,0) - x*y + log(1 + exp(-|x|))
            bce = jnp.maximum(x, 0.0) - x * y + jnp.log1p(jnp.exp(-jnp.abs(x)))
            acc_gate[...] = jnp.sum(bce, axis=0, keepdims=True)

            p = gst_pred_ref[...].astype(f32)
            t = gst_tgt_ref[...].astype(f32)
            acc_gst[...] = jnp.sum(jnp.abs(p - t), axis=0, keepdims=True)

        # ---- finalize: the only cross-lane/sublane reductions in the kernel --
        @pl.when(j == nj - 1)
        def _fin():
            lane = jax.lax.broadcasted_iota(jnp.int32, (1, 8, 128), 2)
            out_ref[...] = (jnp.where(lane == 0, jnp.sum(acc_mel[...]), 0.0)
                            + jnp.where(lane == 1, jnp.sum(acc_gate[...]), 0.0)
                            + jnp.where(lane == 2, jnp.sum(acc_att[...]), 0.0)
                            + jnp.where(lane == 3, jnp.sum(acc_gst[...]), 0.0))

    att_acc_shape = (w, h) if guide_pretransposed else (h, w)

    if conservative:
        cost = None
    else:
        total_bytes = (nbytes(mel_out3) + nbytes(mel_post3) + nbytes(mel_tgt3)
                       + nbytes(guide3) + nbytes(align3) + resident
                       + n_splits * 8 * 128 * 4)
        cost = pl.CostEstimate(
            flops=int(6 * B * n_mel * T + 3 * B * w * h
                      + 5 * B * Tg + 2 * gst_pred2.size),
            transcendentals=int(2 * B * Tg),
            bytes_accessed=int(total_bytes))

    if core_parallel:
        dims = (pltpu.CORE_PARALLEL, pltpu.ARBITRARY)
    else:
        dims = ("parallel", "arbitrary")

    out = pl.pallas_call(
        kernel,
        out_shape=jax.ShapeDtypeStruct((n_splits, 8, 128), jnp.float32),
        grid_spec=pltpu.PrefetchScalarGridSpec(
            num_scalar_prefetch=0,
            grid=(n_splits, steps),
            in_specs=[
                _tiled_spec((Bb, n_mel, T), bmap3, n_buffers),   # mel_out
                _tiled_spec((Bb, n_mel, T), bmap3, n_buffers),   # mel_out_postnet
                _tiled_spec((Bb, n_mel, T), bmap3, n_buffers),   # mel_target
                pl.BlockSpec((B, Tg), const2),                   # gate_out   (resident)
                pl.BlockSpec((B, Tg), const2),                   # gate_target(resident)
                _tiled_spec((Bb, GH, GW), bmap3, n_buffers),     # guide
                _tiled_spec((Bb, w, h), bmap3, n_buffers),       # alignments
                pl.BlockSpec(gst_pred2.shape, const2),           # tpse_gst_pred
                pl.BlockSpec(gst_tgt2.shape, const2),            # gst_target
            ],
            out_specs=pl.BlockSpec((1, 8, 128), lambda i, j: (i, 0, 0)),
            scratch_shapes=[
                pltpu.VMEM((n_mel, T), jnp.float32),      # mel elementwise partials
                pltpu.VMEM(att_acc_shape, jnp.float32),   # attention partials
                pltpu.VMEM((1, Tg), jnp.float32),         # gate lane partials
                pltpu.VMEM((1, G), jnp.float32),          # gst lane partials
            ]),
        compiler_params=pltpu.CompilerParams(
            dimension_semantics=dims,
            vmem_limit_bytes=vmem_limit),
        cost_estimate=cost,
    )(mel_out3, mel_post3, mel_tgt3, gate_out2, gate_tgt2,
      guide3, align3, gst_pred2, gst_tgt2)

    sums = jnp.sum(out[:, 0, :], axis=0)     # (128,), only lanes 0..3 are used
    return sums[0], sums[1], sums[2], sums[3]


class Tacotron2Loss:
    """JAX/Pallas re-implementation of the PyTorch Tacotron2Loss forward."""

    def __init__(self, hparams=None, iteration=0):
        self.hparams = hparams
        self.guide_decay = 0.99999
        self.scale = 40.0 * self.guide_decay ** iteration
        self.guide_lowbound = 1.0

    def __call__(self, model_output, targets):
        (_, mel_out, mel_out_postnet, gate_out, alignments_out,
         tpse_gst_pred, gst_target) = model_output
        mel_target, gate_target, guide_target = targets[0], targets[1], targets[2]

        _, w, h = alignments_out.shape

        # view(-1, 1) in torch only changes the shape; mean/sum are unchanged.
        gate_out2 = gate_out.reshape(gate_out.shape[0], -1)
        gate_tgt2 = gate_target.reshape(gate_target.shape[0], -1)

        has_gst = tpse_gst_pred is not None
        if has_gst:
            gst_pred2 = tpse_gst_pred.reshape(tpse_gst_pred.shape[0], -1)
            gst_tgt2 = jax.lax.stop_gradient(
                gst_target.reshape(gst_target.shape[0], -1))
        else:
            gst_pred2 = jnp.zeros((1, 128), jnp.float32)
            gst_tgt2 = jnp.zeros((1, 128), jnp.float32)

        # guide_target.transpose(2,1)[:, :w, :h] == transpose(guide_target[:, :h, :w]).
        # Fast path: NO wrapper transpose/copy — the kernel reads the
        # un-transposed guide (sliced in VMEM) and transposes the alignment
        # block on-chip. If guide_target is heavily padded, pre-slice only
        # (still no transpose round-trip).
        GH, GW = guide_target.shape[1], guide_target.shape[2]
        if GH * GW > 1.5 * h * w:
            guide_in = guide_target[:, :h, :w]
        else:
            guide_in = guide_target

        try:
            mel_sum, gate_sum, att_sum, gst_sum = _run_loss_kernel(
                mel_out, mel_out_postnet, mel_target,
                gate_out2, gate_tgt2, guide_in, alignments_out,
                gst_pred2, gst_tgt2, guide_pretransposed=False)
        except Exception:
            # Conservative fallback (previously validated layout): materialize
            # the exact transposed guide in the wrapper, no on-chip transpose,
            # no core-parallel / deep buffering.
            guide_t = jnp.transpose(guide_target[:, :h, :w], (0, 2, 1))
            mel_sum, gate_sum, att_sum, gst_sum = _run_loss_kernel(
                mel_out, mel_out_postnet, mel_target,
                gate_out2, gate_tgt2, guide_t, alignments_out,
                gst_pred2, gst_tgt2, guide_pretransposed=True, conservative=True)

        # Finalize (outside the hot loop): divide by TRUE element counts and
        # apply the fixed factors (matches torch's mean semantics).
        mel_loss = mel_sum / float(mel_out.size)
        gate_loss = 1.3 * gate_sum / float(gate_out2.size)
        loss_atten = att_sum / float(alignments_out.size) * self.scale
        if has_gst:
            emb_loss = gst_sum / float(gst_pred2.size)
        else:
            # TODO(synk): torch returns an int tensor(0) here; we return float 0.0.
            emb_loss = jnp.asarray(0.0, dtype=jnp.float32)

        # guide-scale decay bookkeeping (host-side, matches the PyTorch module)
        self.scale *= self.guide_decay
        if self.scale < self.guide_lowbound:
            self.scale = self.guide_lowbound

        return mel_loss, gate_loss, loss_atten, emb_loss


def _reference_losses(model_output, targets, scale):
    """Pure-JAX reference of the PyTorch forward, for self-check."""
    (_, mel_out, mel_out_postnet, gate_out, alignments_out,
     tpse_gst_pred, gst_target) = model_output
    mel_target, gate_target, guide_target = targets
    _, w, h = alignments_out.shape
    guide = jnp.transpose(guide_target, (0, 2, 1))[:, :w, :h]

    mel_loss = (jnp.mean((mel_out - mel_target) ** 2)
                + jnp.mean((mel_out_postnet - mel_target) ** 2))
    x = gate_out.reshape(-1, 1)
    y = gate_target.reshape(-1, 1)
    bce = jnp.maximum(x, 0.0) - x * y + jnp.log1p(jnp.exp(-jnp.abs(x)))
    gate_loss = 1.3 * jnp.mean(bce)
    loss_atten = jnp.mean(jnp.abs(guide * alignments_out)) * scale
    emb_loss = jnp.mean(jnp.abs(tpse_gst_pred - gst_target))
    return mel_loss, gate_loss, loss_atten, emb_loss


if __name__ == "__main__":
    key = jax.random.PRNGKey(0)
    B, n_mel, T_dec, T_enc, gst_dim = 2, 4, 16, 8, 32

    ks = jax.random.split(key, 9)
    mel_out = jax.random.normal(ks[0], (B, n_mel, T_dec), jnp.float32)
    mel_out_postnet = jax.random.normal(ks[1], (B, n_mel, T_dec), jnp.float32)
    mel_target = jax.random.normal(ks[2], (B, n_mel, T_dec), jnp.float32)
    gate_out = jax.random.normal(ks[3], (B, T_dec), jnp.float32)
    gate_target = (jax.random.uniform(ks[4], (B, T_dec)) > 0.5).astype(jnp.float32)
    alignments_out = jax.nn.softmax(
        jax.random.normal(ks[5], (B, T_dec, T_enc), jnp.float32), axis=-1)
    # guide_target padded slightly larger than (h, w) so the kernel-side slice
    # of the un-transposed guide tile is exercised.
    guide_target = jax.random.uniform(ks[6], (B, T_enc + 2, T_dec + 2), jnp.float32)
    tpse_gst_pred = jax.random.normal(ks[7], (B, gst_dim), jnp.float32)
    gst_target = jax.random.normal(ks[8], (B, gst_dim), jnp.float32)

    model_output = (None, mel_out, mel_out_postnet, gate_out, alignments_out,
                    tpse_gst_pred, gst_target)
    targets = (mel_target, gate_target, guide_target)

    loss_mod = Tacotron2Loss(hparams=None, iteration=0)
    scale_used = loss_mod.scale
    mel_loss, gate_loss, loss_atten, emb_loss = loss_mod(model_output, targets)
    jax.block_until_ready((mel_loss, gate_loss, loss_atten, emb_loss))

    # Self-check against a pure-JAX reference of the PyTorch semantics.
    ref = _reference_losses(model_output, targets, scale_used)
    got = (mel_loss, gate_loss, loss_atten, emb_loss)
    for g, r in zip(got, ref):
        assert jnp.allclose(g, r, rtol=1e-5, atol=1e-5), (g, r)

    print("KERNEL_OK")
</pallas_src>

<mosaic_0001>
module attributes {stable_mosaic.version = 11 : i64} {
  func.func @kernel(%arg0: i32, %arg1: i32, %arg2: memref<1x4x16xf32, #tpu.memory_space<vmem>>, %arg3: memref<1x4x16xf32, #tpu.memory_space<vmem>>, %arg4: memref<1x4x16xf32, #tpu.memory_space<vmem>>, %arg5: memref<2x16xf32, #tpu.memory_space<vmem>>, %arg6: memref<2x16xf32, #tpu.memory_space<vmem>>, %arg7: memref<1x10x18xf32, #tpu.memory_space<vmem>>, %arg8: memref<1x16x8xf32, #tpu.memory_space<vmem>>, %arg9: memref<2x32xf32, #tpu.memory_space<vmem>>, %arg10: memref<2x32xf32, #tpu.memory_space<vmem>>, %arg11: memref<1x8x128xf32, #tpu.memory_space<vmem>>, %arg12: memref<4x16xf32, #tpu.memory_space<vmem>>, %arg13: memref<8x16xf32, #tpu.memory_space<vmem>>, %arg14: memref<1x16xf32, #tpu.memory_space<vmem>>, %arg15: memref<1x32xf32, #tpu.memory_space<vmem>>) attributes {dimension_semantics = [#tpu.dimension_semantics<parallel>, #tpu.dimension_semantics<arbitrary>], iteration_bounds = array<i64: 2, 1>, scalar_prefetch = 0 : i64, scratch_operands = 4 : i64, tpu.core_type = #tpu.core_type<tc>, window_params = [{transform_indices = @transform_0, window_bounds = array<i64: 1, 4, 16>}, {transform_indices = @transform_1, window_bounds = array<i64: 1, 4, 16>}, {transform_indices = @transform_2, window_bounds = array<i64: 1, 4, 16>}, {pipeline_mode = #tpu.pipeline_mode<synchronous>, transform_indices = @transform_3, window_bounds = array<i64: 2, 16>}, {pipeline_mode = #tpu.pipeline_mode<synchronous>, transform_indices = @transform_4, window_bounds = array<i64: 2, 16>}, {transform_indices = @transform_5, window_bounds = array<i64: 1, 10, 18>}, {transform_indices = @transform_6, window_bounds = array<i64: 1, 16, 8>}, {pipeline_mode = #tpu.pipeline_mode<synchronous>, transform_indices = @transform_7, window_bounds = array<i64: 2, 32>}, {pipeline_mode = #tpu.pipeline_mode<synchronous>, transform_indices = @transform_8, window_bounds = array<i64: 2, 32>}, {transform_indices = @transform_9, window_bounds = array<i64: 1, 8, 128>}]} {
    %c0_i32 = arith.constant 0 : i32
    %0 = arith.cmpi eq, %arg1, %c0_i32 : i32
    %1 = arith.extui %0 : i1 to i32
    %c0_i32_0 = arith.constant 0 : i32
    %2 = arith.cmpi ne, %1, %c0_i32_0 : i32
    scf.if %2 {
      %cst_29 = arith.constant 0.000000e+00 : f32
      %32 = vector.broadcast %cst_29 : f32 to vector<4x16xf32>
      %c0_30 = arith.constant 0 : index
      %c0_31 = arith.constant 0 : index
      %33 = vector.load %arg12[%c0_30, %c0_31] : memref<4x16xf32, #tpu.memory_space<vmem>>, vector<4x16xf32>
      tpu.vector_store %arg12[%c0_30, %c0_31], %32 {strides = array<i32>} : memref<4x16xf32, #tpu.memory_space<vmem>>, vector<4x16xf32>,
      %cst_32 = arith.constant 0.000000e+00 : f32
      %34 = vector.broadcast %cst_32 : f32 to vector<8x16xf32>
      %c0_33 = arith.constant 0 : index
      %c0_34 = arith.constant 0 : index
      %35 = vector.load %arg13[%c0_33, %c0_34] : memref<8x16xf32, #tpu.memory_space<vmem>>, vector<8x16xf32>
      tpu.vector_store %arg13[%c0_33, %c0_34], %34 {strides = array<i32>} : memref<8x16xf32, #tpu.memory_space<vmem>>, vector<8x16xf32>,
      %cst_35 = arith.constant 0.000000e+00 : f32
      %36 = vector.broadcast %cst_35 : f32 to vector<1x16xf32>
      %c0_36 = arith.constant 0 : index
      %c0_37 = arith.constant 0 : index
      %37 = vector.load %arg14[%c0_36, %c0_37] : memref<1x16xf32, #tpu.memory_space<vmem>>, vector<1x16xf32>
      tpu.vector_store %arg14[%c0_36, %c0_37], %36 {strides = array<i32>} : memref<1x16xf32, #tpu.memory_space<vmem>>, vector<1x16xf32>,
      %cst_38 = arith.constant 0.000000e+00 : f32
      %38 = vector.broadcast %cst_38 : f32 to vector<1x32xf32>
      %c0_39 = arith.constant 0 : index
      %c0_40 = arith.constant 0 : index
      %39 = vector.load %arg15[%c0_39, %c0_40] : memref<1x32xf32, #tpu.memory_space<vmem>>, vector<1x32xf32>
      tpu.vector_store %arg15[%c0_39, %c0_40], %38 {strides = array<i32>} : memref<1x32xf32, #tpu.memory_space<vmem>>, vector<1x32xf32>,
    } else {
    }
    %c0 = arith.constant 0 : index
    %c0_1 = arith.constant 0 : index
    %c0_2 = arith.constant 0 : index
    %3 = vector.load %arg2[%c0, %c0_1, %c0_2] : memref<1x4x16xf32, #tpu.memory_space<vmem>>, vector<1x4x16xf32>
    %c0_3 = arith.constant 0 : index
    %c0_4 = arith.constant 0 : index
    %c0_5 = arith.constant 0 : index
    %4 = vector.load %arg3[%c0_3, %c0_4, %c0_5] : memref<1x4x16xf32, #tpu.memory_space<vmem>>, vector<1x4x16xf32>
    %c0_6 = arith.constant 0 : index
    %c0_7 = arith.constant 0 : index
    %c0_8 = arith.constant 0 : index
    %5 = vector.load %arg4[%c0_6, %c0_7, %c0_8] : memref<1x4x16xf32, #tpu.memory_space<vmem>>, vector<1x4x16xf32>
    %6 = arith.subf %3, %5 : vector<1x4x16xf32>
    %7 = arith.subf %4, %5 : vector<1x4x16xf32>
    %c0_9 = arith.constant 0 : index
    %c0_10 = arith.constant 0 : index
    %8 = vector.load %arg12[%c0_9, %c0_10] : memref<4x16xf32, #tpu.memory_space<vmem>>, vector<4x16xf32>
    %9 = arith.mulf %6, %6 : vector<1x4x16xf32>
    %10 = arith.mulf %7, %7 : vector<1x4x16xf32>
    %11 = arith.addf %9, %10 : vector<1x4x16xf32>
    %cst = arith.constant dense<0.000000e+00> : vector<4x16xf32>
    %12 = vector.multi_reduction <add>, %11, %cst [0] : vector<1x4x16xf32> to vector<4x16xf32>
    %13 = arith.addf %8, %12 : vector<4x16xf32>
    %c0_11 = arith.constant 0 : index
    %c0_12 = arith.constant 0 : index
    %14 = vector.load %arg12[%c0_11, %c0_12] : memref<4x16xf32, #tpu.memory_space<vmem>>, vector<4x16xf32>
    tpu.vector_store %arg12[%c0_11, %c0_12], %13 {strides = array<i32>} : memref<4x16xf32, #tpu.memory_space<vmem>>, vector<4x16xf32>,
    %c0_13 = arith.constant 0 : index
    %c0_14 = arith.constant 0 : index
    %c0_15 = arith.constant 0 : index
    %15 = vector.load %arg8[%c0_13, %c0_14, %c0_15] : memref<1x16x8xf32, #tpu.memory_space<vmem>>, vector<1x16x8xf32>
    %16 = tpu.transpose %15, [0, 2, 1] : vector<1x16x8xf32> -> vector<1x8x16xf32>
    %c0_16 = arith.constant 0 : index
    %c0_17 = arith.constant 0 : index
    %c0_18 = arith.constant 0 : index
    %17 = vector.load %arg7[%c0_16, %c0_17, %c0_18] : memref<1x10x18xf32, #tpu.memory_space<vmem>>, vector<1x8x16xf32>
    %18 = arith.mulf %16, %17 : vector<1x8x16xf32>
    %19 = math.absf %18 : vector<1x8x16xf32>
    %c0_19 = arith.constant 0 : index
    %c0_20 = arith.constant 0 : index
    %20 = vector.load %arg13[%c0_19, %c0_20] : memref<8x16xf32, #tpu.memory_space<vmem>>, vector<8x16xf32>
    %cst_21 = arith.constant dense<0.000000e+00> : vector<8x16xf32>
    %21 = vector.multi_reduction <add>, %19, %cst_21 [0] : vector<1x8x16xf32> to vector<8x16xf32>
    %22 = arith.addf %20, %21 : vector<8x16xf32>
    %c0_22 = arith.constant 0 : index
    %c0_23 = arith.constant 0 : index
    %23 = vector.load %arg13[%c0_22, %c0_23] : memref<8x16xf32, #tpu.memory_space<vmem>>, vector<8x16xf32>
    tpu.vector_store %arg13[%c0_22, %c0_23], %22 {strides = array<i32>} : memref<8x16xf32, #tpu.memory_space<vmem>>, vector<8x16xf32>,
    %c0_i32_24 = arith.constant 0 : i32
    %24 = arith.cmpi eq, %arg0, %c0_i32_24 : i32
    %c0_i32_25 = arith.constant 0 : i32
    %25 = arith.cmpi eq, %arg1, %c0_i32_25 : i32
    %26 = arith.andi %24, %25 : i1
    %27 = arith.extui %26 : i1 to i32
    %c0_i32_26 = arith.constant 0 : i32
    %28 = arith.cmpi ne, %27, %c0_i32_26 : i32
    scf.if %28 {
      %c0_29 = arith.constant 0 : index
      %c0_30 = arith.constant 0 : index
      %32 = vector.load %arg5[%c0_29, %c0_30] : memref<2x16xf32, #tpu.memory_space<vmem>>, vector<2x16xf32>
      %c0_31 = arith.constant 0 : index
      %c0_32 = arith.constant 0 : index
      %33 = vector.load %arg6[%c0_31, %c0_32] : memref<2x16xf32, #tpu.memory_space<vmem>>, vector<2x16xf32>
      %cst_33 = arith.constant 0.000000e+00 : f32
      %34 = vector.broadcast %cst_33 : f32 to vector<2x16xf32>
      %35 = arith.maximumf %32, %34 : vector<2x16xf32>
      %36 = arith.mulf %32, %33 : vector<2x16xf32>
      %37 = arith.subf %35, %36 : vector<2x16xf32>
      %38 = math.absf %32 : vector<2x16xf32>
      %cst_34 = arith.constant 0.000000e+00 : f32
      %39 = vector.broadcast %cst_34 : f32 to vector<2x16xf32>
      %40 = arith.subf %39, %38 : vector<2x16xf32>
      %41 = math.exp %40 : vector<2x16xf32>
      %42 = math.log1p %41 : vector<2x16xf32>
      %43 = arith.addf %37, %42 : vector<2x16xf32>
      %cst_35 = arith.constant dense<0.000000e+00> : vector<16xf32>
      %44 = vector.multi_reduction <add>, %43, %cst_35 [0] : vector<2x16xf32> to vector<16xf32>
      %45 = vector.shape_cast %44 : vector<16xf32> to vector<1x16xf32>
      %c0_36 = arith.constant 0 : index
      %c0_37 = arith.constant 0 : index
      %46 = vector.load %arg14[%c0_36, %c0_37] : memref<1x16xf32, #tpu.memory_space<vmem>>, vector<1x16xf32>
      tpu.vector_store %arg14[%c0_36, %c0_37], %45 {strides = array<i32>} : memref<1x16xf32, #tpu.memory_space<vmem>>, vector<1x16xf32>,
      %c0_38 = arith.constant 0 : index
      %c0_39 = arith.constant 0 : index
      %47 = vector.load %arg9[%c0_38, %c0_39] : memref<2x32xf32, #tpu.memory_space<vmem>>, vector<2x32xf32>
      %c0_40 = arith.constant 0 : index
      %c0_41 = arith.constant 0 : index
      %48 = vector.load %arg10[%c0_40, %c0_41] : memref<2x32xf32, #tpu.memory_space<vmem>>, vector<2x32xf32>
      %49 = arith.subf %47, %48 : vector<2x32xf32>
      %50 = math.absf %49 : vector<2x32xf32>
      %cst_42 = arith.constant dense<0.000000e+00> : vector<32xf32>
      %51 = vector.multi_reduction <add>, %50, %cst_42 [0] : vector<2x32xf32> to vector<32xf32>
      %52 = vector.shape_cast %51 : vector<32xf32> to vector<1x32xf32>
      %c0_43 = arith.constant 0 : index
      %c0_44 = arith.constant 0 : index
      %53 = vector.load %arg15[%c0_43, %c0_44] : memref<1x32xf32, #tpu.memory_space<vmem>>, vector<1x32xf32>
      tpu.vector_store %arg15[%c0_43, %c0_44], %52 {strides = array<i32>} : memref<1x32xf32, #tpu.memory_space<vmem>>, vector<1x32xf32>,
    } else {
    }
    %c0_i32_27 = arith.constant 0 : i32
    %29 = arith.cmpi eq, %arg1, %c0_i32_27 : i32
    %30 = arith.extui %29 : i1 to i32
    %c0_i32_28 = arith.constant 0 : i32
    %31 = arith.cmpi ne, %30, %c0_i32_28 : i32
    scf.if %31 {
      %32 = tpu.iota {dimensions = array<i32: 2>} : vector<1x8x128xi32>
      %c0_i32_29 = arith.constant 0 : i32
      %33 = vector.broadcast %c0_i32_29 : i32 to vector<1x8x128xi32>
      %34 = arith.cmpi eq, %32, %33 : vector<1x8x128xi32>
      %c0_30 = arith.constant 0 : index
      %c0_31 = arith.constant 0 : index
      %35 = vector.load %arg12[%c0_30, %c0_31] : memref<4x16xf32, #tpu.memory_space<vmem>>, vector<4x16xf32>
      %36 = vector.shape_cast %35 : vector<4x16xf32> to vector<1x4x16xf32>
      %cst_32 = arith.constant dense<0.000000e+00> : vector<1xf32>
      %37 = vector.multi_reduction <add>, %36, %cst_32 [1, 2] : vector<1x4x16xf32> to vector<1xf32>
      %38 = vector.shape_cast %37 : vector<1xf32> to vector<1x1x1xf32>
      %39 = vector.extract %38[0, 0, 0] : f32 from vector<1x1x1xf32>
      %cst_33 = arith.constant 0.000000e+00 : f32
      %40 = vector.broadcast %39 : f32 to vector<1x8x128xf32>
      %41 = vector.broadcast %cst_33 : f32 to vector<1x8x128xf32>
      %42 = arith.select %34, %40, %41 : vector<1x8x128xi1>, vector<1x8x128xf32>
      %c1_i32 = arith.constant 1 : i32
      %43 = vector.broadcast %c1_i32 : i32 to vector<1x8x128xi32>
      %44 = arith.cmpi eq, %32, %43 : vector<1x8x128xi32>
      %c0_34 = arith.constant 0 : index
      %c0_35 = arith.constant 0 : index
      %45 = vector.load %arg14[%c0_34, %c0_35] : memref<1x16xf32, #tpu.memory_space<vmem>>, vector<1x16xf32>
      %46 = vector.shape_cast %45 : vector<1x16xf32> to vector<1x1x16xf32>
      %cst_36 = arith.constant dense<0.000000e+00> : vector<1xf32>
      %47 = vector.multi_reduction <add>, %46, %cst_36 [1, 2] : vector<1x1x16xf32> to vector<1xf32>
      %48 = vector.shape_cast %47 : vector<1xf32> to vector<1x1x1xf32>
      %49 = vector.extract %48[0, 0, 0] : f32 from vector<1x1x1xf32>
      %cst_37 = arith.constant 0.000000e+00 : f32
      %50 = vector.broadcast %49 : f32 to vector<1x8x128xf32>
      %51 = vector.broadcast %cst_37 : f32 to vector<1x8x128xf32>
      %52 = arith.select %44, %50, %51 : vector<1x8x128xi1>, vector<1x8x128xf32>
      %53 = arith.addf %42, %52 : vector<1x8x128xf32>
      %c2_i32 = arith.constant 2 : i32
      %54 = vector.broadcast %c2_i32 : i32 to vector<1x8x128xi32>
      %55 = arith.cmpi eq, %32, %54 : vector<1x8x128xi32>
      %c0_38 = arith.constant 0 : index
      %c0_39 = arith.constant 0 : index
      %56 = vector.load %arg13[%c0_38, %c0_39] : memref<8x16xf32, #tpu.memory_space<vmem>>, vector<8x16xf32>
      %57 = vector.shape_cast %56 : vector<8x16xf32> to vector<1x8x16xf32>
      %cst_40 = arith.constant dense<0.000000e+00> : vector<1xf32>
      %58 = vector.multi_reduction <add>, %57, %cst_40 [1, 2] : vector<1x8x16xf32> to vector<1xf32>
      %59 = vector.shape_cast %58 : vector<1xf32> to vector<1x1x1xf32>
      %60 = vector.extract %59[0, 0, 0] : f32 from vector<1x1x1xf32>
      %cst_41 = arith.constant 0.000000e+00 : f32
      %61 = vector.broadcast %60 : f32 to vector<1x8x128xf32>
      %62 = vector.broadcast %cst_41 : f32 to vector<1x8x128xf32>
      %63 = arith.select %55, %61, %62 : vector<1x8x128xi1>, vector<1x8x128xf32>
      %64 = arith.addf %53, %63 : vector<1x8x128xf32>
      %c3_i32 = arith.constant 3 : i32
      %65 = vector.broadcast %c3_i32 : i32 to vector<1x8x128xi32>
      %66 = arith.cmpi eq, %32, %65 : vector<1x8x128xi32>
      %c0_42 = arith.constant 0 : index
      %c0_43 = arith.constant 0 : index
      %67 = vector.load %arg15[%c0_42, %c0_43] : memref<1x32xf32, #tpu.memory_space<vmem>>, vector<1x32xf32>
      %68 = vector.shape_cast %67 : vector<1x32xf32> to vector<1x1x32xf32>
      %cst_44 = arith.constant dense<0.000000e+00> : vector<1xf32>
      %69 = vector.multi_reduction <add>, %68, %cst_44 [1, 2] : vector<1x1x32xf32> to vector<1xf32>
      %70 = vector.shape_cast %69 : vector<1xf32> to vector<1x1x1xf32>
      %71 = vector.extract %70[0, 0, 0] : f32 from vector<1x1x1xf32>
      %cst_45 = arith.constant 0.000000e+00 : f32
      %72 = vector.broadcast %71 : f32 to vector<1x8x128xf32>
      %73 = vector.broadcast %cst_45 : f32 to vector<1x8x128xf32>
      %74 = arith.select %66, %72, %73 : vector<1x8x128xi1>, vector<1x8x128xf32>
      %75 = arith.addf %64, %74 : vector<1x8x128xf32>
      %c0_46 = arith.constant 0 : index
      %c0_47 = arith.constant 0 : index
      %c0_48 = arith.constant 0 : index
      %76 = vector.load %arg11[%c0_46, %c0_47, %c0_48] : memref<1x8x128xf32, #tpu.memory_space<vmem>>, vector<1x8x128xf32>
      tpu.vector_store %arg11[%c0_46, %c0_47, %c0_48], %75 {strides = array<i32>} : memref<1x8x128xf32, #tpu.memory_space<vmem>>, vector<1x8x128xf32>,
    } else {
    }
    return
  }
  func.func @transform_0(%arg0: i32, %arg1: i32) -> (i32, i32, i32) {
    %c1_i32 = arith.constant 1 : i32
    %0 = arith.muli %arg0, %c1_i32 : i32
    %1 = arith.addi %0, %arg1 : i32
    %c0_i32 = arith.constant 0 : i32
    %c0_i32_0 = arith.constant 0 : i32
    %c0_i32_1 = arith.constant 0 : i32
    return %1, %c0_i32, %c0_i32_0 : i32, i32, i32
  }
  func.func @transform_1(%arg0: i32, %arg1: i32) -> (i32, i32, i32) {
    %c1_i32 = arith.constant 1 : i32
    %0 = arith.muli %arg0, %c1_i32 : i32
    %1 = arith.addi %0, %arg1 : i32
    %c0_i32 = arith.constant 0 : i32
    %c0_i32_0 = arith.constant 0 : i32
    %c0_i32_1 = arith.constant 0 : i32
    return %1, %c0_i32, %c0_i32_0 : i32, i32, i32
  }
  func.func @transform_2(%arg0: i32, %arg1: i32) -> (i32, i32, i32) {
    %c1_i32 = arith.constant 1 : i32
    %0 = arith.muli %arg0, %c1_i32 : i32
    %1 = arith.addi %0, %arg1 : i32
    %c0_i32 = arith.constant 0 : i32
    %c0_i32_0 = arith.constant 0 : i32
    %c0_i32_1 = arith.constant 0 : i32
    return %1, %c0_i32, %c0_i32_0 : i32, i32, i32
  }
  func.func @transform_3(%arg0: i32, %arg1: i32) -> (i32, i32) {
    %c0_i32 = arith.constant 0 : i32
    %c0_i32_0 = arith.constant 0 : i32
    %c0_i32_1 = arith.constant 0 : i32
    return %c0_i32, %c0_i32_0 : i32, i32
  }
  func.func @transform_4(%arg0: i32, %arg1: i32) -> (i32, i32) {
    %c0_i32 = arith.constant 0 : i32
    %c0_i32_0 = arith.constant 0 : i32
    %c0_i32_1 = arith.constant 0 : i32
    return %c0_i32, %c0_i32_0 : i32, i32
  }
  func.func @transform_5(%arg0: i32, %arg1: i32) -> (i32, i32, i32) {
    %c1_i32 = arith.constant 1 : i32
    %0 = arith.muli %arg0, %c1_i32 : i32
    %1 = arith.addi %0, %arg1 : i32
    %c0_i32 = arith.constant 0 : i32
    %c0_i32_0 = arith.constant 0 : i32
    %c0_i32_1 = arith.constant 0 : i32
    return %1, %c0_i32, %c0_i32_0 : i32, i32, i32
  }
  func.func @transform_6(%arg0: i32, %arg1: i32) -> (i32, i32, i32) {
    %c1_i32 = arith.constant 1 : i32
    %0 = arith.muli %arg0, %c1_i32 : i32
    %1 = arith.addi %0, %arg1 : i32
    %c0_i32 = arith.constant 0 : i32
    %c0_i32_0 = arith.constant 0 : i32
    %c0_i32_1 = arith.constant 0 : i32
    return %1, %c0_i32, %c0_i32_0 : i32, i32, i32
  }
  func.func @transform_7(%arg0: i32, %arg1: i32) -> (i32, i32) {
    %c0_i32 = arith.constant 0 : i32
    %c0_i32_0 = arith.constant 0 : i32
    %c0_i32_1 = arith.constant 0 : i32
    return %c0_i32, %c0_i32_0 : i32, i32
  }
  func.func @transform_8(%arg0: i32, %arg1: i32) -> (i32, i32) {
    %c0_i32 = arith.constant 0 : i32
    %c0_i32_0 = arith.constant 0 : i32
    %c0_i32_1 = arith.constant 0 : i32
    return %c0_i32, %c0_i32_0 : i32, i32
  }
  func.func @transform_9(%arg0: i32, %arg1: i32) -> (i32, i32, i32) {
    %c0_i32 = arith.constant 0 : i32
    %c0_i32_0 = arith.constant 0 : i32
    %c0_i32_1 = arith.constant 0 : i32
    return %arg0, %c0_i32, %c0_i32_0 : i32, i32, i32
  }
}

module attributes {stable_mosaic.version = 11 : i64} {
  func.func @kernel(%arg0: i32, %arg1: i32, %arg2: memref<1x4x16xf32, #tpu.memory_space<vmem>>, %arg3: memref<1x4x16xf32, #tpu.memory_space<vmem>>, %arg4: memref<1x4x16xf32, #tpu.memory_space<vmem>>, %arg5: memref<2x16xf32, #tpu.memory_space<vmem>>, %arg6: memref<2x16xf32, #tpu.memory_space<vmem>>, %arg7: memref<1x16x8xf32, #tpu.memory_space<vmem>>, %arg8: memref<1x16x8xf32, #tpu.memory_space<vmem>>, %arg9: memref<2x32xf32, #tpu.memory_space<vmem>>, %arg10: memref<2x32xf32, #tpu.memory_space<vmem>>, %arg11: memref<1x8x128xf32, #tpu.memory_space<vmem>>, %arg12: memref<4x16xf32, #tpu.memory_space<vmem>>, %arg13: memref<16x8xf32, #tpu.memory_space<vmem>>, %arg14: memref<1x16xf32, #tpu.memory_space<vmem>>, %arg15: memref<1x32xf32, #tpu.memory_space<vmem>>) attributes {dimension_semantics = [#tpu.dimension_semantics<parallel>, #tpu.dimension_semantics<arbitrary>], iteration_bounds = array<i64: 2, 1>, scalar_prefetch = 0 : i64, scratch_operands = 4 : i64, tpu.core_type = #tpu.core_type<tc>, window_params = [{transform_indices = @transform_0, window_bounds = array<i64: 1, 4, 16>}, {transform_indices = @transform_1, window_bounds = array<i64: 1, 4, 16>}, {transform_indices = @transform_2, window_bounds = array<i64: 1, 4, 16>}, {pipeline_mode = #tpu.pipeline_mode<synchronous>, transform_indices = @transform_3, window_bounds = array<i64: 2, 16>}, {pipeline_mode = #tpu.pipeline_mode<synchronous>, transform_indices = @transform_4, window_bounds = array<i64: 2, 16>}, {transform_indices = @transform_5, window_bounds = array<i64: 1, 16, 8>}, {transform_indices = @transform_6, window_bounds = array<i64: 1, 16, 8>}, {pipeline_mode = #tpu.pipeline_mode<synchronous>, transform_indices = @transform_7, window_bounds = array<i64: 2, 32>}, {pipeline_mode = #tpu.pipeline_mode<synchronous>, transform_indices = @transform_8, window_bounds = array<i64: 2, 32>}, {transform_indices = @transform_9, window_bounds = array<i64: 1, 8, 128>}]} {
    %c0_i32 = arith.constant 0 : i32
    %0 = arith.cmpi eq, %arg1, %c0_i32 : i32
    %1 = arith.extui %0 : i1 to i32
    %c0_i32_0 = arith.constant 0 : i32
    %2 = arith.cmpi ne, %1, %c0_i32_0 : i32
    scf.if %2 {
      %cst_29 = arith.constant 0.000000e+00 : f32
      %31 = vector.broadcast %cst_29 : f32 to vector<4x16xf32>
      %c0_30 = arith.constant 0 : index
      %c0_31 = arith.constant 0 : index
      %32 = vector.load %arg12[%c0_30, %c0_31] : memref<4x16xf32, #tpu.memory_space<vmem>>, vector<4x16xf32>
      tpu.vector_store %arg12[%c0_30, %c0_31], %31 {strides = array<i32>} : memref<4x16xf32, #tpu.memory_space<vmem>>, vector<4x16xf32>,
      %cst_32 = arith.constant 0.000000e+00 : f32
      %33 = vector.broadcast %cst_32 : f32 to vector<16x8xf32>
      %c0_33 = arith.constant 0 : index
      %c0_34 = arith.constant 0 : index
      %34 = vector.load %arg13[%c0_33, %c0_34] : memref<16x8xf32, #tpu.memory_space<vmem>>, vector<16x8xf32>
      tpu.vector_store %arg13[%c0_33, %c0_34], %33 {strides = array<i32>} : memref<16x8xf32, #tpu.memory_space<vmem>>, vector<16x8xf32>,
      %cst_35 = arith.constant 0.000000e+00 : f32
      %35 = vector.broadcast %cst_35 : f32 to vector<1x16xf32>
      %c0_36 = arith.constant 0 : index
      %c0_37 = arith.constant 0 : index
      %36 = vector.load %arg14[%c0_36, %c0_37] : memref<1x16xf32, #tpu.memory_space<vmem>>, vector<1x16xf32>
      tpu.vector_store %arg14[%c0_36, %c0_37], %35 {strides = array<i32>} : memref<1x16xf32, #tpu.memory_space<vmem>>, vector<1x16xf32>,
      %cst_38 = arith.constant 0.000000e+00 : f32
      %37 = vector.broadcast %cst_38 : f32 to vector<1x32xf32>
      %c0_39 = arith.constant 0 : index
      %c0_40 = arith.constant 0 : index
      %38 = vector.load %arg15[%c0_39, %c0_40] : memref<1x32xf32, #tpu.memory_space<vmem>>, vector<1x32xf32>
      tpu.vector_store %arg15[%c0_39, %c0_40], %37 {strides = array<i32>} : memref<1x32xf32, #tpu.memory_space<vmem>>, vector<1x32xf32>,
    } else {
    }
    %c0 = arith.constant 0 : index
    %c0_1 = arith.constant 0 : index
    %c0_2 = arith.constant 0 : index
    %3 = vector.load %arg2[%c0, %c0_1, %c0_2] : memref<1x4x16xf32, #tpu.memory_space<vmem>>, vector<1x4x16xf32>
    %c0_3 = arith.constant 0 : index
    %c0_4 = arith.constant 0 : index
    %c0_5 = arith.constant 0 : index
    %4 = vector.load %arg3[%c0_3, %c0_4, %c0_5] : memref<1x4x16xf32, #tpu.memory_space<vmem>>, vector<1x4x16xf32>
    %c0_6 = arith.constant 0 : index
    %c0_7 = arith.constant 0 : index
    %c0_8 = arith.constant 0 : index
    %5 = vector.load %arg4[%c0_6, %c0_7, %c0_8] : memref<1x4x16xf32, #tpu.memory_space<vmem>>, vector<1x4x16xf32>
    %6 = arith.subf %3, %5 : vector<1x4x16xf32>
    %7 = arith.subf %4, %5 : vector<1x4x16xf32>
    %c0_9 = arith.constant 0 : index
    %c0_10 = arith.constant 0 : index
    %8 = vector.load %arg12[%c0_9, %c0_10] : memref<4x16xf32, #tpu.memory_space<vmem>>, vector<4x16xf32>
    %9 = arith.mulf %6, %6 : vector<1x4x16xf32>
    %10 = arith.mulf %7, %7 : vector<1x4x16xf32>
    %11 = arith.addf %9, %10 : vector<1x4x16xf32>
    %cst = arith.constant dense<0.000000e+00> : vector<4x16xf32>
    %12 = vector.multi_reduction <add>, %11, %cst [0] : vector<1x4x16xf32> to vector<4x16xf32>
    %13 = arith.addf %8, %12 : vector<4x16xf32>
    %c0_11 = arith.constant 0 : index
    %c0_12 = arith.constant 0 : index
    %14 = vector.load %arg12[%c0_11, %c0_12] : memref<4x16xf32, #tpu.memory_space<vmem>>, vector<4x16xf32>
    tpu.vector_store %arg12[%c0_11, %c0_12], %13 {strides = array<i32>} : memref<4x16xf32, #tpu.memory_space<vmem>>, vector<4x16xf32>,
    %c0_13 = arith.constant 0 : index
    %c0_14 = arith.constant 0 : index
    %c0_15 = arith.constant 0 : index
    %15 = vector.load %arg8[%c0_13, %c0_14, %c0_15] : memref<1x16x8xf32, #tpu.memory_space<vmem>>, vector<1x16x8xf32>
    %c0_16 = arith.constant 0 : index
    %c0_17 = arith.constant 0 : index
    %c0_18 = arith.constant 0 : index
    %16 = vector.load %arg7[%c0_16, %c0_17, %c0_18] : memref<1x16x8xf32, #tpu.memory_space<vmem>>, vector<1x16x8xf32>
    %17 = arith.mulf %16, %15 : vector<1x16x8xf32>
    %18 = math.absf %17 : vector<1x16x8xf32>
    %c0_19 = arith.constant 0 : index
    %c0_20 = arith.constant 0 : index
    %19 = vector.load %arg13[%c0_19, %c0_20] : memref<16x8xf32, #tpu.memory_space<vmem>>, vector<16x8xf32>
    %cst_21 = arith.constant dense<0.000000e+00> : vector<16x8xf32>
    %20 = vector.multi_reduction <add>, %18, %cst_21 [0] : vector<1x16x8xf32> to vector<16x8xf32>
    %21 = arith.addf %19, %20 : vector<16x8xf32>
    %c0_22 = arith.constant 0 : index
    %c0_23 = arith.constant 0 : index
    %22 = vector.load %arg13[%c0_22, %c0_23] : memref<16x8xf32, #tpu.memory_space<vmem>>, vector<16x8xf32>
    tpu.vector_store %arg13[%c0_22, %c0_23], %21 {strides = array<i32>} : memref<16x8xf32, #tpu.memory_space<vmem>>, vector<16x8xf32>,
    %c0_i32_24 = arith.constant 0 : i32
    %23 = arith.cmpi eq, %arg0, %c0_i32_24 : i32
    %c0_i32_25 = arith.constant 0 : i32
    %24 = arith.cmpi eq, %arg1, %c0_i32_25 : i32
    %25 = arith.andi %23, %24 : i1
    %26 = arith.extui %25 : i1 to i32
    %c0_i32_26 = arith.constant 0 : i32
    %27 = arith.cmpi ne, %26, %c0_i32_26 : i32
    scf.if %27 {
      %c0_29 = arith.constant 0 : index
      %c0_30 = arith.constant 0 : index
      %31 = vector.load %arg5[%c0_29, %c0_30] : memref<2x16xf32, #tpu.memory_space<vmem>>, vector<2x16xf32>
      %c0_31 = arith.constant 0 : index
      %c0_32 = arith.constant 0 : index
      %32 = vector.load %arg6[%c0_31, %c0_32] : memref<2x16xf32, #tpu.memory_space<vmem>>, vector<2x16xf32>
      %cst_33 = arith.constant 0.000000e+00 : f32
      %33 = vector.broadcast %cst_33 : f32 to vector<2x16xf32>
      %34 = arith.maximumf %31, %33 : vector<2x16xf32>
      %35 = arith.mulf %31, %32 : vector<2x16xf32>
      %36 = arith.subf %34, %35 : vector<2x16xf32>
      %37 = math.absf %31 : vector<2x16xf32>
      %cst_34 = arith.constant 0.000000e+00 : f32
      %38 = vector.broadcast %cst_34 : f32 to vector<2x16xf32>
      %39 = arith.subf %38, %37 : vector<2x16xf32>
      %40 = math.exp %39 : vector<2x16xf32>
      %41 = math.log1p %40 : vector<2x16xf32>
      %42 = arith.addf %36, %41 : vector<2x16xf32>
      %cst_35 = arith.constant dense<0.000000e+00> : vector<16xf32>
      %43 = vector.multi_reduction <add>, %42, %cst_35 [0] : vector<2x16xf32> to vector<16xf32>
      %44 = vector.shape_cast %43 : vector<16xf32> to vector<1x16xf32>
      %c0_36 = arith.constant 0 : index
      %c0_37 = arith.constant 0 : index
      %45 = vector.load %arg14[%c0_36, %c0_37] : memref<1x16xf32, #tpu.memory_space<vmem>>, vector<1x16xf32>
      tpu.vector_store %arg14[%c0_36, %c0_37], %44 {strides = array<i32>} : memref<1x16xf32, #tpu.memory_space<vmem>>, vector<1x16xf32>,
      %c0_38 = arith.constant 0 : index
      %c0_39 = arith.constant 0 : index
      %46 = vector.load %arg9[%c0_38, %c0_39] : memref<2x32xf32, #tpu.memory_space<vmem>>, vector<2x32xf32>
      %c0_40 = arith.constant 0 : index
      %c0_41 = arith.constant 0 : index
      %47 = vector.load %arg10[%c0_40, %c0_41] : memref<2x32xf32, #tpu.memory_space<vmem>>, vector<2x32xf32>
      %48 = arith.subf %46, %47 : vector<2x32xf32>
      %49 = math.absf %48 : vector<2x32xf32>
      %cst_42 = arith.constant dense<0.000000e+00> : vector<32xf32>
      %50 = vector.multi_reduction <add>, %49, %cst_42 [0] : vector<2x32xf32> to vector<32xf32>
      %51 = vector.shape_cast %50 : vector<32xf32> to vector<1x32xf32>
      %c0_43 = arith.constant 0 : index
      %c0_44 = arith.constant 0 : index
      %52 = vector.load %arg15[%c0_43, %c0_44] : memref<1x32xf32, #tpu.memory_space<vmem>>, vector<1x32xf32>
      tpu.vector_store %arg15[%c0_43, %c0_44], %51 {strides = array<i32>} : memref<1x32xf32, #tpu.memory_space<vmem>>, vector<1x32xf32>,
    } else {
    }
    %c0_i32_27 = arith.constant 0 : i32
    %28 = arith.cmpi eq, %arg1, %c0_i32_27 : i32
    %29 = arith.extui %28 : i1 to i32
    %c0_i32_28 = arith.constant 0 : i32
    %30 = arith.cmpi ne, %29, %c0_i32_28 : i32
    scf.if %30 {
      %31 = tpu.iota {dimensions = array<i32: 2>} : vector<1x8x128xi32>
      %c0_i32_29 = arith.constant 0 : i32
      %32 = vector.broadcast %c0_i32_29 : i32 to vector<1x8x128xi32>
      %33 = arith.cmpi eq, %31, %32 : vector<1x8x128xi32>
      %c0_30 = arith.constant 0 : index
      %c0_31 = arith.constant 0 : index
      %34 = vector.load %arg12[%c0_30, %c0_31] : memref<4x16xf32, #tpu.memory_space<vmem>>, vector<4x16xf32>
      %35 = vector.shape_cast %34 : vector<4x16xf32> to vector<1x4x16xf32>
      %cst_32 = arith.constant dense<0.000000e+00> : vector<1xf32>
      %36 = vector.multi_reduction <add>, %35, %cst_32 [1, 2] : vector<1x4x16xf32> to vector<1xf32>
      %37 = vector.shape_cast %36 : vector<1xf32> to vector<1x1x1xf32>
      %38 = vector.extract %37[0, 0, 0] : f32 from vector<1x1x1xf32>
      %cst_33 = arith.constant 0.000000e+00 : f32
      %39 = vector.broadcast %38 : f32 to vector<1x8x128xf32>
      %40 = vector.broadcast %cst_33 : f32 to vector<1x8x128xf32>
      %41 = arith.select %33, %39, %40 : vector<1x8x128xi1>, vector<1x8x128xf32>
      %c1_i32 = arith.constant 1 : i32
      %42 = vector.broadcast %c1_i32 : i32 to vector<1x8x128xi32>
      %43 = arith.cmpi eq, %31, %42 : vector<1x8x128xi32>
      %c0_34 = arith.constant 0 : index
      %c0_35 = arith.constant 0 : index
      %44 = vector.load %arg14[%c0_34, %c0_35] : memref<1x16xf32, #tpu.memory_space<vmem>>, vector<1x16xf32>
      %45 = vector.shape_cast %44 : vector<1x16xf32> to vector<1x1x16xf32>
      %cst_36 = arith.constant dense<0.000000e+00> : vector<1xf32>
      %46 = vector.multi_reduction <add>, %45, %cst_36 [1, 2] : vector<1x1x16xf32> to vector<1xf32>
      %47 = vector.shape_cast %46 : vector<1xf32> to vector<1x1x1xf32>
      %48 = vector.extract %47[0, 0, 0] : f32 from vector<1x1x1xf32>
      %cst_37 = arith.constant 0.000000e+00 : f32
      %49 = vector.broadcast %48 : f32 to vector<1x8x128xf32>
      %50 = vector.broadcast %cst_37 : f32 to vector<1x8x128xf32>
      %51 = arith.select %43, %49, %50 : vector<1x8x128xi1>, vector<1x8x128xf32>
      %52 = arith.addf %41, %51 : vector<1x8x128xf32>
      %c2_i32 = arith.constant 2 : i32
      %53 = vector.broadcast %c2_i32 : i32 to vector<1x8x128xi32>
      %54 = arith.cmpi eq, %31, %53 : vector<1x8x128xi32>
      %c0_38 = arith.constant 0 : index
      %c0_39 = arith.constant 0 : index
      %55 = vector.load %arg13[%c0_38, %c0_39] : memref<16x8xf32, #tpu.memory_space<vmem>>, vector<16x8xf32>
      %56 = vector.shape_cast %55 : vector<16x8xf32> to vector<1x16x8xf32>
      %cst_40 = arith.constant dense<0.000000e+00> : vector<1xf32>
      %57 = vector.multi_reduction <add>, %56, %cst_40 [1, 2] : vector<1x16x8xf32> to vector<1xf32>
      %58 = vector.shape_cast %57 : vector<1xf32> to vector<1x1x1xf32>
      %59 = vector.extract %58[0, 0, 0] : f32 from vector<1x1x1xf32>
      %cst_41 = arith.constant 0.000000e+00 : f32
      %60 = vector.broadcast %59 : f32 to vector<1x8x128xf32>
      %61 = vector.broadcast %cst_41 : f32 to vector<1x8x128xf32>
      %62 = arith.select %54, %60, %61 : vector<1x8x128xi1>, vector<1x8x128xf32>
      %63 = arith.addf %52, %62 : vector<1x8x128xf32>
      %c3_i32 = arith.constant 3 : i32
      %64 = vector.broadcast %c3_i32 : i32 to vector<1x8x128xi32>
      %65 = arith.cmpi eq, %31, %64 : vector<1x8x128xi32>
      %c0_42 = arith.constant 0 : index
      %c0_43 = arith.constant 0 : index
      %66 = vector.load %arg15[%c0_42, %c0_43] : memref<1x32xf32, #tpu.memory_space<vmem>>, vector<1x32xf32>
      %67 = vector.shape_cast %66 : vector<1x32xf32> to vector<1x1x32xf32>
      %cst_44 = arith.constant dense<0.000000e+00> : vector<1xf32>
      %68 = vector.multi_reduction <add>, %67, %cst_44 [1, 2] : vector<1x1x32xf32> to vector<1xf32>
      %69 = vector.shape_cast %68 : vector<1xf32> to vector<1x1x1xf32>
      %70 = vector.extract %69[0, 0, 0] : f32 from vector<1x1x1xf32>
      %cst_45 = arith.constant 0.000000e+00 : f32
      %71 = vector.broadcast %70 : f32 to vector<1x8x128xf32>
      %72 = vector.broadcast %cst_45 : f32 to vector<1x8x128xf32>
      %73 = arith.select %65, %71, %72 : vector<1x8x128xi1>, vector<1x8x128xf32>
      %74 = arith.addf %63, %73 : vector<1x8x128xf32>
      %c0_46 = arith.constant 0 : index
      %c0_47 = arith.constant 0 : index
      %c0_48 = arith.constant 0 : index
      %75 = vector.load %arg11[%c0_46, %c0_47, %c0_48] : memref<1x8x128xf32, #tpu.memory_space<vmem>>, vector<1x8x128xf32>
      tpu.vector_store %arg11[%c0_46, %c0_47, %c0_48], %74 {strides = array<i32>} : memref<1x8x128xf32, #tpu.memory_space<vmem>>, vector<1x8x128xf32>,
    } else {
    }
    return
  }
  func.func @transform_0(%arg0: i32, %arg1: i32) -> (i32, i32, i32) {
    %c1_i32 = arith.constant 1 : i32
    %0 = arith.muli %arg0, %c1_i32 : i32
    %1 = arith.addi %0, %arg1 : i32
    %c0_i32 = arith.constant 0 : i32
    %c0_i32_0 = arith.constant 0 : i32
    %c0_i32_1 = arith.constant 0 : i32
    return %1, %c0_i32, %c0_i32_0 : i32, i32, i32
  }
  func.func @transform_1(%arg0: i32, %arg1: i32) -> (i32, i32, i32) {
    %c1_i32 = arith.constant 1 : i32
    %0 = arith.muli %arg0, %c1_i32 : i32
    %1 = arith.addi %0, %arg1 : i32
    %c0_i32 = arith.constant 0 : i32
    %c0_i32_0 = arith.constant 0 : i32
    %c0_i32_1 = arith.constant 0 : i32
    return %1, %c0_i32, %c0_i32_0 : i32, i32, i32
  }
  func.func @transform_2(%arg0: i32, %arg1: i32) -> (i32, i32, i32) {
    %c1_i32 = arith.constant 1 : i32
    %0 = arith.muli %arg0, %c1_i32 : i32
    %1 = arith.addi %0, %arg1 : i32
    %c0_i32 = arith.constant 0 : i32
    %c0_i32_0 = arith.constant 0 : i32
    %c0_i32_1 = arith.constant 0 : i32
    return %1, %c0_i32, %c0_i32_0 : i32, i32, i32
  }
  func.func @transform_3(%arg0: i32, %arg1: i32) -> (i32, i32) {
    %c0_i32 = arith.constant 0 : i32
    %c0_i32_0 = arith.constant 0 : i32
    %c0_i32_1 = arith.constant 0 : i32
    return %c0_i32, %c0_i32_0 : i32, i32
  }
  func.func @transform_4(%arg0: i32, %arg1: i32) -> (i32, i32) {
    %c0_i32 = arith.constant 0 : i32
    %c0_i32_0 = arith.constant 0 : i32
    %c0_i32_1 = arith.constant 0 : i32
    return %c0_i32, %c0_i32_0 : i32, i32
  }
  func.func @transform_5(%arg0: i32, %arg1: i32) -> (i32, i32, i32) {
    %c1_i32 = arith.constant 1 : i32
    %0 = arith.muli %arg0, %c1_i32 : i32
    %1 = arith.addi %0, %arg1 : i32
    %c0_i32 = arith.constant 0 : i32
    %c0_i32_0 = arith.constant 0 : i32
    %c0_i32_1 = arith.constant 0 : i32
    return %1, %c0_i32, %c0_i32_0 : i32, i32, i32
  }
  func.func @transform_6(%arg0: i32, %arg1: i32) -> (i32, i32, i32) {
    %c1_i32 = arith.constant 1 : i32
    %0 = arith.muli %arg0, %c1_i32 : i32
    %1 = arith.addi %0, %arg1 : i32
    %c0_i32 = arith.constant 0 : i32
    %c0_i32_0 = arith.constant 0 : i32
    %c0_i32_1 = arith.constant 0 : i32
    return %1, %c0_i32, %c0_i32_0 : i32, i32, i32
  }
  func.func @transform_7(%arg0: i32, %arg1: i32) -> (i32, i32) {
    %c0_i32 = arith.constant 0 : i32
    %c0_i32_0 = arith.constant 0 : i32
    %c0_i32_1 = arith.constant 0 : i32
    return %c0_i32, %c0_i32_0 : i32, i32
  }
  func.func @transform_8(%arg0: i32, %arg1: i32) -> (i32, i32) {
    %c0_i32 = arith.constant 0 : i32
    %c0_i32_0 = arith.constant 0 : i32
    %c0_i32_1 = arith.constant 0 : i32
    return %c0_i32, %c0_i32_0 : i32, i32
  }
  func.func @transform_9(%arg0: i32, %arg1: i32) -> (i32, i32, i32) {
    %c0_i32 = arith.constant 0 : i32
    %c0_i32_0 = arith.constant 0 : i32
    %c0_i32_1 = arith.constant 0 : i32
    return %arg0, %c0_i32, %c0_i32_0 : i32, i32, i32
  }
}

</mosaic_0001>

<llo_original>
// kernel: tpu_custom_call.1
$region0: #{tpu_custom_call.1}
  #allocation0 [shape = 'u32[]', space=smem, size = 0x4, offset = 0x4, fixed_abs, tag = 'smem constant byte address 0x4 - core index']
  #allocation1 [shape = 'u32[72,128]{1,0:T(1,128)}', space=vmem, size = 0x9000, scoped, tag = 'internal scratch']
  #allocation2 [shape = 'f32[4,16]{1,0:T(4,128)}', space=vmem, size = 0x800, scoped, tag = 'scratch operand']
  #allocation3 [shape = 'f32[8,16]{1,0:T(8,128)}', space=vmem, size = 0x1000, scoped, tag = 'scratch operand']
  #allocation4 [shape = 'f32[1,16]{1,0:T(1,128)}', space=vmem, size = 0x200, scoped, tag = 'scratch operand']
  #allocation5 [shape = 'f32[1,32]{1,0:T(1,128)}', space=vmem, size = 0x200, scoped, tag = 'scratch operand']
  %s0 = inlined_call_operand.vmem [shape: f32[2,4,16], index: 0, kind: input, shape index: {}]
  %s1 = inlined_call_operand.vmem [shape: f32[2,4,16], index: 1, kind: input, shape index: {}]
  %s2 = inlined_call_operand.vmem [shape: f32[2,4,16], index: 2, kind: input, shape index: {}]
  %s3 = inlined_call_operand.vmem [shape: f32[2,16], index: 3, kind: input, shape index: {}]
  %s4 = inlined_call_operand.vmem [shape: f32[2,16], index: 4, kind: input, shape index: {}]
  %s5 = inlined_call_operand.vmem [shape: f32[2,10,18], index: 5, kind: input, shape index: {}]
  %s6 = inlined_call_operand.vmem [shape: f32[2,16,8], index: 6, kind: input, shape index: {}]
  %s7 = inlined_call_operand.vmem [shape: f32[2,32], index: 7, kind: input, shape index: {}]
  %s8 = inlined_call_operand.vmem [shape: f32[2,32], index: 8, kind: input, shape index: {}]
  %s9 = inlined_call_operand.hbm [shape: f32[2,8,128], index: 9, kind: output, shape index: {}]
  %s10 = sld [smem:[#allocation0]]
  $region81: #{tpu_custom_call.1} parent=0
    _
  %s12 = ssub.s32 1, %s10
  %s13 = scalar_select 0, %s12, %s10
  $region1: #{tpu_custom_call.1} parent=0
    #allocation6 [shape = 'u8[8192]{0}', space=vmem, size = 0x2000, scoped, tag = 'output window, operand 0']
    #allocation7 [shape = 's32[2]{0}', space=sflag, size = 0x8, scoped, tag = 'scoped memory for tpu_custom_call.1']
    %14 = vsyncpa [#allocation7], 0
    %s15 = scalar_lea.sflag [#allocation7], 1
    %16 = vsyncpa %s15, 0
    loop: start=0, step=1, limit=4
    $region2: #{tpu_custom_call.1} parent=1 // loop_pre_header
      _
    $region3: #{tpu_custom_call.1} parent=1 // loop_header
      %s18 = sphi 0, %s22
      %p19 = scmp.ge.s32.totalorder %s18, 4
      %s25 = sphi 0, %s37
      %s26 = sphi 0, %s33
      %s27 = sphi 0, %s25
      %s28 = sphi 0, %s26
      %s29 = sphi 0, %s27
      %s30 = sphi 0, %s28
      %s42 = sphi 0, %s44
      %s45 = sphi 0, %s42
      %s46 = sphi 0, %s45
      %s62 = sphi 0, %s46
      %s70 = sphi 0, %s72
      %s73 = sphi 0, %s70
      %s74 = sphi 0, %s73
      %s90 = sphi 0, %s74
      %s98 = sphi 0, %s100
      %s101 = sphi 0, %s98
      %s102 = sphi 0, %s101
      %s118 = sphi 0, %s102
      %s122 = sphi 0, %s122
      %s124 = sphi 0, %s122
      %s125 = sphi 0, %s124
      %s139 = sphi 0, %s125
      %s143 = sphi 0, %s143
      %s145 = sphi 0, %s143
      %s146 = sphi 0, %s145
      %s160 = sphi 0, %s146
      %s168 = sphi 0, %s170
      %s171 = sphi 0, %s168
      %s172 = sphi 0, %s171
      %s188 = sphi 0, %s172
      %s196 = sphi 0, %s198
      %s199 = sphi 0, %s196
      %s200 = sphi 0, %s199
      %s216 = sphi 0, %s200
      %s220 = sphi 0, %s220
      %s222 = sphi 0, %s220
      %s223 = sphi 0, %s222
      %s237 = sphi 0, %s223
      %s241 = sphi 0, %s241
      %s243 = sphi 0, %s241
      %s244 = sphi 0, %s243
      %s258 = sphi 0, %s244
      %s264 = sphi 0, %s266
      %s267 = sphi 0, %s264
      %s268 = sphi 0, %s267
      %s284 = sphi 0, %s268
    $region4: #{tpu_custom_call.1} parent=1 // loop_header_branch
      %21 = sbr.rel (%p19) target = $region8
    $region5: #{tpu_custom_call.1} parent=1 // loop_body
      %s23 = ssub.s32 %s18, 1
      %s24 = ssub.s32 %s18, 2
      %s31 = sadd.s32 1, %s26
      %p32 = scmp.ge.s32.totalorder %s31, 1
      %s33 = scalar_select %p32, 0, %s31
      %s34 = sadd.s32 1, %s25
      %s35 = scalar_select %p32, %s34, %s25
      %p36 = scmp.ge.s32.totalorder %s35, 2
      %s37 = scalar_select %p36, 0, %s35
      %s38 = sadd.s32 %s25, %s26
      %s39 = sadd.s32 %s37, %s33
      %s40 = ssub.s32 %s38, %s39
      %p41 = scmp.eq.s32.totalorder %s40, 0
      %s43 = sadd.s32 %s42, 1
      %s44 = scalar_select %p41, %s42, %s43
      %p47 = pneg %p41
      %p48 = scmp.eq.s32.totalorder %s18, 1
      %p49 = por %p47, %p48
      %p50 = scmp.ne.s32.totalorder %s42, %s45
      %p51 = scmp.eq.s32.totalorder %s18, 0
      %p52 = por %p50, %p51
      %p53 = scmp.ne.s32.totalorder %s42, %s45
      %p54 = scmp.eq.s32.totalorder %s23, 1
      %p55 = por %p53, %p54
      %p56 = scmp.ne.s32.totalorder %s45, %s46
      %p57 = scmp.eq.s32.totalorder %s23, 0
      %p58 = por %p56, %p57
      %p59 = scmp.ne.s32.totalorder %s45, %s46
      %p60 = scmp.eq.s32.totalorder %s24, 1
      %p61 = por %p59, %p60
      %p63 = scmp.ne.s32.totalorder %s46, %s62
      %p64 = scmp.eq.s32.totalorder %s24, 0
      %p65 = por %p63, %p64
      %s66 = sadd.s32 %s25, %s26
      %s67 = sadd.s32 %s37, %s33
      %s68 = ssub.s32 %s66, %s67
      %p69 = scmp.eq.s32.totalorder %s68, 0
      %s71 = sadd.s32 %s70, 1
      %s72 = scalar_select %p69, %s70, %s71
      %p75 = pneg %p69
      %p76 = scmp.eq.s32.totalorder %s18, 1
      %p77 = por %p75, %p76
      %p78 = scmp.ne.s32.totalorder %s70, %s73
      %p79 = scmp.eq.s32.totalorder %s18, 0
      %p80 = por %p78, %p79
      %p81 = scmp.ne.s32.totalorder %s70, %s73
      %p82 = scmp.eq.s32.totalorder %s23, 1
      %p83 = por %p81, %p82
      %p84 = scmp.ne.s32.totalorder %s73, %s74
      %p85 = scmp.eq.s32.totalorder %s23, 0
      %p86 = por %p84, %p85
      %p87 = scmp.ne.s32.totalorder %s73, %s74
      %p88 = scmp.eq.s32.totalorder %s24, 1
      %p89 = por %p87, %p88
      %p91 = scmp.ne.s32.totalorder %s74, %s90
      %p92 = scmp.eq.s32.totalorder %s24, 0
      %p93 = por %p91, %p92
      %s94 = sadd.s32 %s25, %s26
      %s95 = sadd.s32 %s37, %s33
      %s96 = ssub.s32 %s94, %s95
      %p97 = scmp.eq.s32.totalorder %s96, 0
      %s99 = sadd.s32 %s98, 1
      %s100 = scalar_select %p97, %s98, %s99
      %p103 = pneg %p97
      %p104 = scmp.eq.s32.totalorder %s18, 1
      %p105 = por %p103, %p104
      %p106 = scmp.ne.s32.totalorder %s98, %s101
      %p107 = scmp.eq.s32.totalorder %s18, 0
      %p108 = por %p106, %p107
      %p109 = scmp.ne.s32.totalorder %s98, %s101
      %p110 = scmp.eq.s32.totalorder %s23, 1
      %p111 = por %p109, %p110
      %p112 = scmp.ne.s32.totalorder %s101, %s102
      %p113 = scmp.eq.s32.totalorder %s23, 0
      %p114 = por %p112, %p113
      %p115 = scmp.ne.s32.totalorder %s101, %s102
      %p116 = scmp.eq.s32.totalorder %s24, 1
      %p117 = por %p115, %p116
      %p119 = scmp.ne.s32.totalorder %s102, %s118
      %p120 = scmp.eq.s32.totalorder %s24, 0
      %p121 = por %p119, %p120
      %s123 = sadd.s32 %s122, 1
      %p126 = scmp.eq.s32.totalorder %s18, 1
      %p127 = scmp.ne.s32.totalorder %s122, %s124
      %p128 = scmp.eq.s32.totalorder %s18, 0
      %p129 = por %p127, %p128
      %p130 = scmp.ne.s32.totalorder %s122, %s124
      %p131 = scmp.eq.s32.totalorder %s23, 1
      %p132 = por %p130, %p131
      %p133 = scmp.ne.s32.totalorder %s124, %s125
      %p134 = scmp.eq.s32.totalorder %s23, 0
      %p135 = por %p133, %p134
      %p136 = scmp.ne.s32.totalorder %s124, %s125
      %p137 = scmp.eq.s32.totalorder %s24, 1
      %p138 = por %p136, %p137
      %p140 = scmp.ne.s32.totalorder %s125, %s139
      %p141 = scmp.eq.s32.totalorder %s24, 0
      %p142 = por %p140, %p141
      %s144 = sadd.s32 %s143, 1
      %p147 = scmp.eq.s32.totalorder %s18, 1
      %p148 = scmp.ne.s32.totalorder %s143, %s145
      %p149 = scmp.eq.s32.totalorder %s18, 0
      %p150 = por %p148, %p149
      %p151 = scmp.ne.s32.totalorder %s143, %s145
      %p152 = scmp.eq.s32.totalorder %s23, 1
      %p153 = por %p151, %p152
      %p154 = scmp.ne.s32.totalorder %s145, %s146
      %p155 = scmp.eq.s32.totalorder %s23, 0
      %p156 = por %p154, %p155
      %p157 = scmp.ne.s32.totalorder %s145, %s146
      %p158 = scmp.eq.s32.totalorder %s24, 1
      %p159 = por %p157, %p158
      %p161 = scmp.ne.s32.totalorder %s146, %s160
      %p162 = scmp.eq.s32.totalorder %s24, 0
      %p163 = por %p161, %p162
      %s164 = sadd.s32 %s25, %s26
      %s165 = sadd.s32 %s37, %s33
      %s166 = ssub.s32 %s164, %s165
      %p167 = scmp.eq.s32.totalorder %s166, 0
      %s169 = sadd.s32 %s168, 1
      %s170 = scalar_select %p167, %s168, %s169
      %p173 = pneg %p167
      %p174 = scmp.eq.s32.totalorder %s18, 1
      %p175 = por %p173, %p174
      %p176 = scmp.ne.s32.totalorder %s168, %s171
      %p177 = scmp.eq.s32.totalorder %s18, 0
      %p178 = por %p176, %p177
      %p179 = scmp.ne.s32.totalorder %s168, %s171
      %p180 = scmp.eq.s32.totalorder %s23, 1
      %p181 = por %p179, %p180
      %p182 = scmp.ne.s32.totalorder %s171, %s172
      %p183 = scmp.eq.s32.totalorder %s23, 0
      %p184 = por %p182, %p183
      %p185 = scmp.ne.s32.totalorder %s171, %s172
      %p186 = scmp.eq.s32.totalorder %s24, 1
      %p187 = por %p185, %p186
      %p189 = scmp.ne.s32.totalorder %s172, %s188
      %p190 = scmp.eq.s32.totalorder %s24, 0
      %p191 = por %p189, %p190
      %s192 = sadd.s32 %s25, %s26
      %s193 = sadd.s32 %s37, %s33
      %s194 = ssub.s32 %s192, %s193
      %p195 = scmp.eq.s32.totalorder %s194, 0
      %s197 = sadd.s32 %s196, 1
      %s198 = scalar_select %p195, %s196, %s197
      %p201 = pneg %p195
      %p202 = scmp.eq.s32.totalorder %s18, 1
      %p203 = por %p201, %p202
      %p204 = scmp.ne.s32.totalorder %s196, %s199
      %p205 = scmp.eq.s32.totalorder %s18, 0
      %p206 = por %p204, %p205
      %p207 = scmp.ne.s32.totalorder %s196, %s199
      %p208 = scmp.eq.s32.totalorder %s23, 1
      %p209 = por %p207, %p208
      %p210 = scmp.ne.s32.totalorder %s199, %s200
      %p211 = scmp.eq.s32.totalorder %s23, 0
      %p212 = por %p210, %p211
      %p213 = scmp.ne.s32.totalorder %s199, %s200
      %p214 = scmp.eq.s32.totalorder %s24, 1
      %p215 = por %p213, %p214
      %p217 = scmp.ne.s32.totalorder %s200, %s216
      %p218 = scmp.eq.s32.totalorder %s24, 0
      %p219 = por %p217, %p218
      %s221 = sadd.s32 %s220, 1
      %p224 = scmp.eq.s32.totalorder %s18, 1
      %p225 = scmp.ne.s32.totalorder %s220, %s222
      %p226 = scmp.eq.s32.totalorder %s18, 0
      %p227 = por %p225, %p226
      %p228 = scmp.ne.s32.totalorder %s220, %s222
      %p229 = scmp.eq.s32.totalorder %s23, 1
      %p230 = por %p228, %p229
      %p231 = scmp.ne.s32.totalorder %s222, %s223
      %p232 = scmp.eq.s32.totalorder %s23, 0
      %p233 = por %p231, %p232
      %p234 = scmp.ne.s32.totalorder %s222, %s223
      %p235 = scmp.eq.s32.totalorder %s24, 1
      %p236 = por %p234, %p235
      %p238 = scmp.ne.s32.totalorder %s223, %s237
      %p239 = scmp.eq.s32.totalorder %s24, 0
      %p240 = por %p238, %p239
      %s242 = sadd.s32 %s241, 1
      %p245 = scmp.eq.s32.totalorder %s18, 1
      %p246 = scmp.ne.s32.totalorder %s241, %s243
      %p247 = scmp.eq.s32.totalorder %s18, 0
      %p248 = por %p246, %p247
      %p249 = scmp.ne.s32.totalorder %s241, %s243
      %p250 = scmp.eq.s32.totalorder %s23, 1
      %p251 = por %p249, %p250
      %p252 = scmp.ne.s32.totalorder %s243, %s244
      %p253 = scmp.eq.s32.totalorder %s23, 0
      %p254 = por %p252, %p253
      %p255 = scmp.ne.s32.totalorder %s243, %s244
      %p256 = scmp.eq.s32.totalorder %s24, 1
      %p257 = por %p255, %p256
      %p259 = scmp.ne.s32.totalorder %s244, %s258
      %p260 = scmp.eq.s32.totalorder %s24, 0
      %p261 = por %p259, %p260
      %s262 = ssub.s32 %s25, %s37
      %p263 = scmp.eq.s32.totalorder %s262, 0
      %s265 = sadd.s32 %s264, 1
      %s266 = scalar_select %p263, %s264, %s265
      %p269 = pneg %p263
      %p270 = scmp.eq.s32.totalorder %s18, 1
      %p271 = por %p269, %p270
      %p272 = scmp.ne.s32.totalorder %s264, %s267
      %p273 = scmp.eq.s32.totalorder %s18, 0
      %p274 = por %p272, %p273
      %p275 = scmp.ne.s32.totalorder %s264, %s267
      %p276 = scmp.eq.s32.totalorder %s23, 1
      %p277 = por %p275, %p276
      %p278 = scmp.ne.s32.totalorder %s267, %s268
      %p279 = scmp.eq.s32.totalorder %s23, 0
      %p280 = por %p278, %p279
      %p281 = scmp.ne.s32.totalorder %s267, %s268
      %p282 = scmp.eq.s32.totalorder %s24, 1
      %p283 = por %p281, %p282
      %p285 = scmp.ne.s32.totalorder %s268, %s284
      %p286 = scmp.eq.s32.totalorder %s24, 0
      %p287 = por %p285, %p286
      %p288 = scmp.le.s32.totalorder 1, %s18
      %p289 = scmp.lt.s32.totalorder %s18, 3
      %p290 = pnand %p288, %p289
      %p291 = pneg %p290
      // Predicated region
      $region9: #{tpu_custom_call.1} parent=5 // pred_check
        _
      $region10: #{tpu_custom_call.1} parent=5 // pred_check_branch
        %293 = sbr.rel (%p290) target = $region12
      $region11: #{tpu_custom_call.1} parent=5 // pred_region
        %s294 = ssub.s32 %s18, 1
        // Predicated region
        $region13: #{tpu_custom_call.1} parent=11 // pred_check
          %p295 = pneg %p135
        $region14: #{tpu_custom_call.1} parent=11 // pred_check_branch
          %297 = sbr.rel (%p295) target = $region16
        $region15: #{tpu_custom_call.1} parent=11 // pred_region
          _
        $region16: #{tpu_custom_call.1} parent=11 // pred_fallthru
          _
        // Predicated region
        $region17: #{tpu_custom_call.1} parent=11 // pred_check
          %p298 = pneg %p156
        $region18: #{tpu_custom_call.1} parent=11 // pred_check_branch
          %300 = sbr.rel (%p298) target = $region20
        $region19: #{tpu_custom_call.1} parent=11 // pred_region
          _
        $region20: #{tpu_custom_call.1} parent=11 // pred_fallthru
          _
        // Predicated region
        $region21: #{tpu_custom_call.1} parent=11 // pred_check
          %p301 = pneg %p233
        $region22: #{tpu_custom_call.1} parent=11 // pred_check_branch
          %303 = sbr.rel (%p301) target = $region24
        $region23: #{tpu_custom_call.1} parent=11 // pred_region
          _
        $region24: #{tpu_custom_call.1} parent=11 // pred_fallthru
          _
        // Predicated region
        $region25: #{tpu_custom_call.1} parent=11 // pred_check
          %p304 = pneg %p254
        $region26: #{tpu_custom_call.1} parent=11 // pred_check_branch
          %306 = sbr.rel (%p304) target = $region28
        $region27: #{tpu_custom_call.1} parent=11 // pred_region
          _
        $region28: #{tpu_custom_call.1} parent=11 // pred_fallthru
          _
      $region12: #{tpu_custom_call.1} parent=5 // pred_fallthru
        _
      %p307 = scmp.lt.s32.totalorder %s18, 2
      // Predicated region
      $region29: #{tpu_custom_call.1} parent=5 // pred_check
        %p308 = pneg %p307
      $region30: #{tpu_custom_call.1} parent=5 // pred_check_branch
        %310 = sbr.rel (%p308) target = $region32
      $region31: #{tpu_custom_call.1} parent=5 // pred_region
        // Predicated region
        $region33: #{tpu_custom_call.1} parent=31 // pred_check
          %p311 = pneg %p52
        $region34: #{tpu_custom_call.1} parent=31 // pred_check_branch
          %313 = sbr.rel (%p311) target = $region36
        $region35: #{tpu_custom_call.1} parent=31 // pred_region
          %s314 = sadd.s32 %s25, %s26
          %p315 = scmp.lt.s32.totalorder %s314, 1
          %s316 = scalar_select %p315, %s314, 1
          %s317 = smul.addr %s316, 4
          %s318 = scalar_lea.vmem %s0, %s317
          %s319 = sadd.s32 %s25, %s26
        $region36: #{tpu_custom_call.1} parent=31 // pred_fallthru
          _
        // Predicated region
        $region37: #{tpu_custom_call.1} parent=31 // pred_check
          %p320 = pneg %p80
        $region38: #{tpu_custom_call.1} parent=31 // pred_check_branch
          %322 = sbr.rel (%p320) target = $region40
        $region39: #{tpu_custom_call.1} parent=31 // pred_region
          %s323 = sadd.s32 %s25, %s26
          %p324 = scmp.lt.s32.totalorder %s323, 1
          %s325 = scalar_select %p324, %s323, 1
          %s326 = smul.addr %s325, 4
          %s327 = scalar_lea.vmem %s1, %s326
          %s328 = sadd.s32 %s25, %s26
        $region40: #{tpu_custom_call.1} parent=31 // pred_fallthru
          _
        // Predicated region
        $region41: #{tpu_custom_call.1} parent=31 // pred_check
          %p329 = pneg %p108
        $region42: #{tpu_custom_call.1} parent=31 // pred_check_branch
          %331 = sbr.rel (%p329) target = $region44
        $region43: #{tpu_custom_call.1} parent=31 // pred_region
          %s332 = sadd.s32 %s25, %s26
          %p333 = scmp.lt.s32.totalorder %s332, 1
          %s334 = scalar_select %p333, %s332, 1
          %s335 = smul.addr %s334, 4
          %s336 = scalar_lea.vmem %s2, %s335
          %s337 = sadd.s32 %s25, %s26
        $region44: #{tpu_custom_call.1} parent=31 // pred_fallthru
          _
        // Predicated region
        $region45: #{tpu_custom_call.1} parent=31 // pred_check
          %p338 = pneg %p178
        $region46: #{tpu_custom_call.1} parent=31 // pred_check_branch
          %340 = sbr.rel (%p338) target = $region48
        $region47: #{tpu_custom_call.1} parent=31 // pred_region
          %s341 = sadd.s32 %s25, %s26
          %p342 = scmp.lt.s32.totalorder %s341, 1
          %s343 = scalar_select %p342, %s341, 1
          %s344 = smul.addr %s343, 2
          %s345 = smul.addr %s344, 8
          %s346 = scalar_lea.vmem %s5, %s345
          %s347 = sadd.s32 %s25, %s26
        $region48: #{tpu_custom_call.1} parent=31 // pred_fallthru
          _
        // Predicated region
        $region49: #{tpu_custom_call.1} parent=31 // pred_check
          %p348 = pneg %p206
        $region50: #{tpu_custom_call.1} parent=31 // pred_check_branch
          %350 = sbr.rel (%p348) target = $region52
        $region51: #{tpu_custom_call.1} parent=31 // pred_region
          %s351 = sadd.s32 %s25, %s26
          %p352 = scmp.lt.s32.totalorder %s351, 1
          %s353 = scalar_select %p352, %s351, 1
          %s354 = smul.addr %s353, 2
          %s355 = smul.addr %s354, 8
          %s356 = scalar_lea.vmem %s6, %s355
          %s357 = sadd.s32 %s25, %s26
        $region52: #{tpu_custom_call.1} parent=31 // pred_fallthru
          _
      $region32: #{tpu_custom_call.1} parent=5 // pred_fallthru
        _
      %p358 = scmp.le.s32.totalorder 1, %s18
      %p359 = scmp.lt.s32.totalorder %s18, 3
      %p360 = pnand %p358, %p359
      %p361 = pneg %p360
      // Predicated region
      $region53: #{tpu_custom_call.1} parent=5 // pred_check
        _
      $region54: #{tpu_custom_call.1} parent=5 // pred_check_branch
        %363 = sbr.rel (%p360) target = $region56
      $region55: #{tpu_custom_call.1} parent=5 // pred_region
        %s364 = ssub.s32 %s18, 1
        %s365 = sadd.s32 %s27, %s28
        %p366 = scmp.lt.s32.totalorder %s365, 1
        %s367 = scalar_select %p366, %s365, 1
        %s368 = smul.addr %s367, 4
        %s369 = scalar_lea.vmem %s0, %s368
        %p370 = pneg %p58
        %p371 = pneg %p55
        %s372 = sadd.s32 %s27, %s28
        %p373 = scmp.lt.s32.totalorder %s372, 1
        %s374 = scalar_select %p373, %s372, 1
        %s375 = smul.addr %s374, 4
        %s376 = scalar_lea.vmem %s1, %s375
        %p377 = pneg %p86
        %p378 = pneg %p83
        %s379 = sadd.s32 %s27, %s28
        %p380 = scmp.lt.s32.totalorder %s379, 1
        %s381 = scalar_select %p380, %s379, 1
        %s382 = smul.addr %s381, 4
        %s383 = scalar_lea.vmem %s2, %s382
        %p384 = pneg %p114
        %p385 = pneg %p111
        %p386 = pneg %p135
        %p387 = pneg %p132
        %p388 = pneg %p156
        %p389 = pneg %p153
        %s390 = sadd.s32 %s27, %s28
        %p391 = scmp.lt.s32.totalorder %s390, 1
        %s392 = scalar_select %p391, %s390, 1
        %s393 = smul.addr %s392, 2
        %s394 = smul.addr %s393, 8
        %s395 = scalar_lea.vmem %s5, %s394
        %p396 = pneg %p184
        %p397 = pneg %p181
        %s398 = sadd.s32 %s27, %s28
        %p399 = scmp.lt.s32.totalorder %s398, 1
        %s400 = scalar_select %p399, %s398, 1
        %s401 = smul.addr %s400, 2
        %s402 = smul.addr %s401, 8
        %s403 = scalar_lea.vmem %s6, %s402
        %p404 = pneg %p212
        %p405 = pneg %p209
        %p406 = pneg %p233
        %p407 = pneg %p230
        %p408 = pneg %p254
        %p409 = pneg %p251
        %p410 = pneg %p280
        %p411 = pneg %p277
        %s412 = sand.u32 %s267, 1
        %s413 = scalar_lea.sflag [#allocation7], %s412
        %s414 = sand.u32 %s267, 1
        %s415 = smul.addr %s414, 8
        %s416 = scalar_lea.vmem [#allocation6], %s415
        %s417 = sadd.s32 %s27, %s28
        %p418 = scmp.lt.s32.totalorder %s417, 1
        %s419 = scalar_select %p418, %s417, 1
        %s420 = smul.addr %s419, 4
        %s421 = scalar_lea.vmem %s0, %s420
        %s422 = sadd.s32 %s27, %s28
        %s423 = sadd.s32 %s27, %s28
        %p424 = scmp.lt.s32.totalorder %s423, 1
        %s425 = scalar_select %p424, %s423, 1
        %s426 = smul.addr %s425, 4
        %s427 = scalar_lea.vmem %s1, %s426
        %s428 = sadd.s32 %s27, %s28
        %s429 = sadd.s32 %s27, %s28
        %p430 = scmp.lt.s32.totalorder %s429, 1
        %s431 = scalar_select %p430, %s429, 1
        %s432 = smul.addr %s431, 4
        %s433 = scalar_lea.vmem %s2, %s432
        %s434 = sadd.s32 %s27, %s28
        %s435 = sadd.s32 %s27, %s28
        %p436 = scmp.lt.s32.totalorder %s435, 1
        %s437 = scalar_select %p436, %s435, 1
        %s438 = smul.addr %s437, 2
        %s439 = smul.addr %s438, 8
        %s440 = scalar_lea.vmem %s5, %s439
        %s441 = sadd.s32 %s27, %s28
        %s442 = sadd.s32 %s27, %s28
        %p443 = scmp.lt.s32.totalorder %s442, 1
        %s444 = scalar_select %p443, %s442, 1
        %s445 = smul.addr %s444, 2
        %s446 = smul.addr %s445, 8
        %s447 = scalar_lea.vmem %s6, %s446
        %s448 = sadd.s32 %s27, %s28
        %p449 = scmp.eq.s32.totalorder %s28, 0
        // Predicated region
        $region57: #{tpu_custom_call.1} parent=55 // pred_check
          %p450 = pneg %p449
        $region58: #{tpu_custom_call.1} parent=55 // pred_check_branch
          %452 = sbr.rel (%p450) target = $region60
        $region59: #{tpu_custom_call.1} parent=55 // pred_region
          %vm453 = vcmask 125952
          %454 = vst.msk [vmem:[#allocation2] sm:$0xf] %vm453, 0.0
          %vm455 = vcmask 130048
          %456 = vst.msk [vmem:[#allocation3] sm:$0xff] %vm455, 0.0
          %vm457 = vcmask 122880
          %458 = vst.msk [vmem:[#allocation4] sm:$0x1] %vm457, 0.0
          %vm459 = vcmask 253952
          %460 = vst.msk [vmem:[#allocation5] sm:$0x1] %vm459, 0.0
        $region60: #{tpu_custom_call.1} parent=55 // pred_fallthru
          _
        %v461 = vld [vmem:[%s421] sm:$0xf]
        %v462 = vld [vmem:[%s427] sm:$0xf]
        %v463 = vld [vmem:[%s433] sm:$0xf]
        %v464 = vsub.f32 %v461, %v463
        %v465 = vsub.f32 %v462, %v463
        %v466 = vld [vmem:[#allocation2] sm:$0xf]
        %v467 = vmul.f32 %v464, %v464
        %v468 = vmul.f32 %v465, %v465
        %v469 = vadd.f32 %v467, %v468
        %v470 = vadd.f32 %v469, 0.0
        %v471 = vadd.f32 %v466, %v470
        %vm472 = vcmask 125952
        %473 = vst.msk [vmem:[#allocation2] sm:$0xf] %vm472, %v471
        %v474 = vld [vmem:[%s447] sm:$0xff]
        %v475 = vld [vmem:[%s447 + $0x8] sm:$0xff]
        %476 = vxpose.xlu0.b32.start [1/16] %v474, 128
        %477 = vxpose.xlu0.b32.cont [2/16] %v475, 128
        %478 = vxpose.xlu0.b32.cont [3/16] 0.0, 128
        %479 = vxpose.xlu0.b32.cont [4/16] 0.0, 128
        %480 = vxpose.xlu0.b32.cont [5/16] 0.0, 128
        %481 = vxpose.xlu0.b32.cont [6/16] 0.0, 128
        %482 = vxpose.xlu0.b32.cont [7/16] 0.0, 128
        %483 = vxpose.xlu0.b32.cont [8/16] 0.0, 128
        %484 = vxpose.xlu0.b32.cont [9/16] 0.0, 128
        %485 = vxpose.xlu0.b32.cont [10/16] 0.0, 128
        %486 = vxpose.xlu0.b32.cont [11/16] 0.0, 128
        %487 = vxpose.xlu0.b32.cont [12/16] 0.0, 128
        %488 = vxpose.xlu0.b32.cont [13/16] 0.0, 128
        %489 = vxpose.xlu0.b32.cont [14/16] 0.0, 128
        %490 = vxpose.xlu0.b32.cont [15/16] 0.0, 128
        %491 = vxpose.xlu0.b32.end [16/16] 0.0, 128
        %v492 = vpop.trf.xlu0
        %v493 = vpop.trf.xlu0
        %v494 = vpop.trf.xlu0
        %v495 = vpop.trf.xlu0
        %v496 = vpop.trf.xlu0
        %v497 = vpop.trf.xlu0
        %v498 = vpop.trf.xlu0
        %v499 = vpop.trf.xlu0
        %v500 = vpop.trf.xlu0
        %v501 = vpop.trf.xlu0
        %v502 = vpop.trf.xlu0
        %v503 = vpop.trf.xlu0
        %v504 = vpop.trf.xlu0
        %v505 = vpop.trf.xlu0
        %v506 = vpop.trf.xlu0
        %v507 = vpop.trf.xlu0
        %v508 = vld [vmem:[%s440] sm:$0xff]
        %v509 = vmul.f32 %v492, %v508
        %v510 = vand.u32 2147483647, %v509
        %v511 = vld [vmem:[#allocation3] sm:$0xff]
        %v512 = vadd.f32 %v510, 0.0
        %v513 = vadd.f32 %v511, %v512
        %vm514 = vcmask 130048
        %515 = vst.msk [vmem:[#allocation3] sm:$0xff] %vm514, %v513
        %p516 = scmp.eq.s32.totalorder %s27, 0
        %p517 = pnand %p516, %p449
        %p518 = pneg %p517
        // Predicated region
        $region61: #{tpu_custom_call.1} parent=55 // pred_check
          _
        $region62: #{tpu_custom_call.1} parent=55 // pred_check_branch
          %520 = sbr.rel (%p517) target = $region64
        $region63: #{tpu_custom_call.1} parent=55 // pred_region
          %v521 = vld [vmem:[%s3] sm:$0x3]
          %v522 = vld [vmem:[%s4] sm:$0x3]
          %v523 = vmax.f32 %v521, 0.0
          %v524 = vmul.f32 %v521, %v522
          %v525 = vsub.f32 %v523, %v524
          %v526 = vand.u32 2147483647, %v521
          %v527 = vsub.f32 0.0, %v526
          %v528 = vmul.f32 %v527, 1.442695
          %v529 = vpow.pop %v528
          %v530 = vadd.f32 %v529, 1.0
          %v531 = vlog2.pop %v530
          %v532 = vmul.f32 %v531, 0.6931472
          %v533 = vmul.f32 -0.5, %v529
          %v534 = vadd.f32 %v533, 1.0
          %v535 = vmul.f32 %v534, %v529
          %v536 = vand.u32 2147483647, %v529
          %vm537 = vcmp.lt.f32.partialorder %v536, 0.0004427343
          %v538 = vsel %vm537, %v535, %v532
          %v539 = vadd.f32 %v525, %v538
          %vm540 = vcmask 123904
          %v541 = vsel %vm540, %v539, 0.0
          %v542 = vrot.slane %v541, 4
          %v543 = vadd.f32 %v541, %v542
          %v544 = vrot.slane %v543, 2
          %v545 = vadd.f32 %v543, %v544
          %v546 = vrot.slane %v545, 1
          %v547 = vadd.f32 %v545, %v546
          %vm548 = vcmask 122880
          %549 = vst.msk [vmem:[#allocation4] sm:$0x1] %vm548, %v547
          %v550 = vld [vmem:[%s7] sm:$0x3]
          %v551 = vld [vmem:[%s8] sm:$0x3]
          %v552 = vsub.f32 %v550, %v551
          %v553 = vand.u32 2147483647, %v552
          %vm554 = vcmask 254976
          %v555 = vsel %vm554, %v553, 0.0
          %v556 = vrot.slane %v555, 4
          %v557 = vadd.f32 %v555, %v556
          %v558 = vrot.slane %v557, 2
          %v559 = vadd.f32 %v557, %v558
          %v560 = vrot.slane %v559, 1
          %v561 = vadd.f32 %v559, %v560
          %vm562 = vcmask 253952
          %563 = vst.msk [vmem:[#allocation5] sm:$0x1] %vm562, %v561
        $region64: #{tpu_custom_call.1} parent=55 // pred_fallthru
          _
        // Predicated region
        $region65: #{tpu_custom_call.1} parent=55 // pred_check
          %p564 = pneg %p449
        $region66: #{tpu_custom_call.1} parent=55 // pred_check_branch
          %566 = sbr.rel (%p564) target = $region68
        $region67: #{tpu_custom_call.1} parent=55 // pred_region
          %v567 = vlaneseq
          %v568 = vand.u32 %v567, 127
          %vm569 = vcmp.eq.s32.totalorder %v568, 0
          %v570 = vld [vmem:[#allocation2] sm:$0xf]
          %v571 = vsel %vm472, %v570, 0.0
          %572 = vadd.xlane.f32.xlu0 %v571
          %v573 = vpop.xlane.xlu0 %572
          %v574 = vrot.slane %v573, 4
          %v575 = vadd.f32 %v573, %v574
          %v576 = vrot.slane %v575, 2
          %v577 = vadd.f32 %v575, %v576
          %v578 = vrot.slane %v577, 1
          %v579 = vadd.f32 %v577, %v578
          %s580 = vtos %v579
          %v581 = vstv %s580
          %v582 = vsel %vm569, %v581, 0.0
          %vm583 = vcmp.eq.s32.totalorder %v568, 1
          %v584 = vld [vmem:[#allocation4] sm:$0x1]
          %vm585 = vcmask 122880
          %v586 = vsel %vm585, %v584, 0.0
          %587 = vadd.xlane.f32.xlu0 %v586
          %v588 = vpop.xlane.xlu0 %587
          %v589 = vrot.slane %v588, 4
          %v590 = vadd.f32 %v588, %v589
          %v591 = vrot.slane %v590, 2
          %v592 = vadd.f32 %v590, %v591
          %v593 = vrot.slane %v592, 1
          %v594 = vadd.f32 %v592, %v593
          %s595 = vtos %v594
          %v596 = vstv %s595
          %v597 = vsel %vm583, %v596, 0.0
          %v598 = vadd.f32 %v582, %v597
          %vm599 = vcmp.eq.s32.totalorder %v568, 2
          %v600 = vld [vmem:[#allocation3] sm:$0xff]
          %v601 = vsel %vm514, %v600, 0.0
          %602 = vadd.xlane.f32.xlu0 %v601
          %v603 = vpop.xlane.xlu0 %602
          %v604 = vrot.slane %v603, 4
          %v605 = vadd.f32 %v603, %v604
          %v606 = vrot.slane %v605, 2
          %v607 = vadd.f32 %v605, %v606
          %v608 = vrot.slane %v607, 1
          %v609 = vadd.f32 %v607, %v608
          %s610 = vtos %v609
          %v611 = vstv %s610
          %v612 = vsel %vm599, %v611, 0.0
          %v613 = vadd.f32 %v598, %v612
          %vm614 = vcmp.eq.s32.totalorder %v568, 3
          %v615 = vld [vmem:[#allocation5] sm:$0x1]
          %vm616 = vcmask 253952
          %v617 = vsel %vm616, %v615, 0.0
          %618 = vadd.xlane.f32.xlu0 %v617
          %v619 = vpop.xlane.xlu0 %618
          %v620 = vrot.slane %v619, 4
          %v621 = vadd.f32 %v619, %v620
          %v622 = vrot.slane %v621, 2
          %v623 = vadd.f32 %v621, %v622
          %v624 = vrot.slane %v623, 1
          %v625 = vadd.f32 %v623, %v624
          %s626 = vtos %v625
          %v627 = vstv %s626
          %v628 = vsel %vm614, %v627, 0.0
          %v629 = vadd.f32 %v613, %v628
          %630 = vst [vmem:[%s416] sm:$0xff] %v629
        $region68: #{tpu_custom_call.1} parent=55 // pred_fallthru
          _
        %s631 = sand.u32 %s267, 1
        %s632 = scalar_lea.sflag [#allocation7], %s631
        %s633 = sand.u32 %s267, 1
        %s634 = smul.addr %s633, 8
        %s635 = scalar_lea.vmem [#allocation6], %s634
        // Predicated region
        $region69: #{tpu_custom_call.1} parent=55 // pred_check
          %p636 = pneg %p277
        $region70: #{tpu_custom_call.1} parent=55 // pred_check_branch
          %638 = sbr.rel (%p636) target = $region72
        $region71: #{tpu_custom_call.1} parent=55 // pred_region
          %640 = vsyncadd %s632, 0
          %s641 = smul.addr %s27, 8
          %s642 = scalar_lea.hbm %s9, %s641
          %s644 = sshll.u32 %s635, 4
          %s645 = int_to_ptr.vmem [resolvable:$true] %s644
          %s646 = sshll.u32 %s642, 4
          %s647 = int_to_ptr.hbm [resolvable:$true] %s646
          %649 = dma.vmem_to_hbm [thread:$0]  %s645, 128, %s647, %s632
        $region72: #{tpu_custom_call.1} parent=55 // pred_fallthru
          _
      $region56: #{tpu_custom_call.1} parent=5 // pred_fallthru
        _
      %p650 = scmp.le.s32.totalorder 2, %s18
      // Predicated region
      $region73: #{tpu_custom_call.1} parent=5 // pred_check
        %p651 = pneg %p650
      $region74: #{tpu_custom_call.1} parent=5 // pred_check_branch
        %653 = sbr.rel (%p651) target = $region76
      $region75: #{tpu_custom_call.1} parent=5 // pred_region
        %s654 = ssub.s32 %s18, 2
        // Predicated region
        $region77: #{tpu_custom_call.1} parent=75 // pred_check
          %p655 = pneg %p283
        $region78: #{tpu_custom_call.1} parent=75 // pred_check_branch
          %657 = sbr.rel (%p655) target = $region80
        $region79: #{tpu_custom_call.1} parent=75 // pred_region
          %s658 = sand.u32 %s268, 1
          %s659 = scalar_lea.sflag [#allocation7], %s658
          %s660 = sand.u32 %s268, 1
          %s661 = smul.addr %s660, 8
          %s662 = scalar_lea.vmem [#allocation6], %s661
          %664 = dma.done %s659, 128
        $region80: #{tpu_custom_call.1} parent=75 // pred_fallthru
          _
      $region76: #{tpu_custom_call.1} parent=5 // pred_fallthru
        _
    $region6: #{tpu_custom_call.1} parent=1 // loop_footer
      %s22 = sadd.s32 1, %s18
    $region7: #{tpu_custom_call.1} parent=1 // loop_footer_branch
      %17 = sbr.rel target = $region3
    $region8: #{tpu_custom_call.1} parent=1 // loop_exit
      _
    %665 = vsyncpa [#allocation7], 1
    %s666 = scalar_lea.sflag [#allocation7], 1
    %667 = vsyncpa %s666, 1

// kernel: tpu_custom_call.1
$region0: #{tpu_custom_call.1}
  #allocation0 [shape = 'u32[]', space=smem, size = 0x4, offset = 0x4, fixed_abs, tag = 'smem constant byte address 0x4 - core index']
  #allocation1 [shape = 'u32[72,128]{1,0:T(1,128)}', space=vmem, size = 0x9000, scoped, tag = 'internal scratch']
  #allocation2 [shape = 'f32[4,16]{1,0:T(4,128)}', space=vmem, size = 0x800, scoped, tag = 'scratch operand']
  #allocation3 [shape = 'f32[16,8]{1,0:T(8,128)}', space=vmem, size = 0x2000, scoped, tag = 'scratch operand']
  #allocation4 [shape = 'f32[1,16]{1,0:T(1,128)}', space=vmem, size = 0x200, scoped, tag = 'scratch operand']
  #allocation5 [shape = 'f32[1,32]{1,0:T(1,128)}', space=vmem, size = 0x200, scoped, tag = 'scratch operand']
  %s0 = inlined_call_operand.vmem [shape: f32[2,4,16], index: 0, kind: input, shape index: {}]
  %s1 = inlined_call_operand.vmem [shape: f32[2,4,16], index: 1, kind: input, shape index: {}]
  %s2 = inlined_call_operand.vmem [shape: f32[2,4,16], index: 2, kind: input, shape index: {}]
  %s3 = inlined_call_operand.vmem [shape: f32[2,16], index: 3, kind: input, shape index: {}]
  %s4 = inlined_call_operand.vmem [shape: f32[2,16], index: 4, kind: input, shape index: {}]
  %s5 = inlined_call_operand.vmem [shape: f32[2,16,8], index: 5, kind: input, shape index: {}]
  %s6 = inlined_call_operand.vmem [shape: f32[2,16,8], index: 6, kind: input, shape index: {}]
  %s7 = inlined_call_operand.vmem [shape: f32[2,32], index: 7, kind: input, shape index: {}]
  %s8 = inlined_call_operand.vmem [shape: f32[2,32], index: 8, kind: input, shape index: {}]
  %s9 = inlined_call_operand.hbm [shape: f32[2,8,128], index: 9, kind: output, shape index: {}]
  %s10 = sld [smem:[#allocation0]]
  $region81: #{tpu_custom_call.1} parent=0
    _
  %s12 = ssub.s32 1, %s10
  %s13 = scalar_select 0, %s12, %s10
  $region1: #{tpu_custom_call.1} parent=0
    #allocation6 [shape = 'u8[8192]{0}', space=vmem, size = 0x2000, scoped, tag = 'output window, operand 0']
    #allocation7 [shape = 's32[2]{0}', space=sflag, size = 0x8, scoped, tag = 'scoped memory for tpu_custom_call.1']
    %14 = vsyncpa [#allocation7], 0
    %s15 = scalar_lea.sflag [#allocation7], 1
    %16 = vsyncpa %s15, 0
    loop: start=0, step=1, limit=4
    $region2: #{tpu_custom_call.1} parent=1 // loop_pre_header
      _
    $region3: #{tpu_custom_call.1} parent=1 // loop_header
      %s18 = sphi 0, %s22
      %p19 = scmp.ge.s32.totalorder %s18, 4
      %s25 = sphi 0, %s37
      %s26 = sphi 0, %s33
      %s27 = sphi 0, %s25
      %s28 = sphi 0, %s26
      %s29 = sphi 0, %s27
      %s30 = sphi 0, %s28
      %s42 = sphi 0, %s44
      %s45 = sphi 0, %s42
      %s46 = sphi 0, %s45
      %s62 = sphi 0, %s46
      %s70 = sphi 0, %s72
      %s73 = sphi 0, %s70
      %s74 = sphi 0, %s73
      %s90 = sphi 0, %s74
      %s98 = sphi 0, %s100
      %s101 = sphi 0, %s98
      %s102 = sphi 0, %s101
      %s118 = sphi 0, %s102
      %s122 = sphi 0, %s122
      %s124 = sphi 0, %s122
      %s125 = sphi 0, %s124
      %s139 = sphi 0, %s125
      %s143 = sphi 0, %s143
      %s145 = sphi 0, %s143
      %s146 = sphi 0, %s145
      %s160 = sphi 0, %s146
      %s168 = sphi 0, %s170
      %s171 = sphi 0, %s168
      %s172 = sphi 0, %s171
      %s188 = sphi 0, %s172
      %s196 = sphi 0, %s198
      %s199 = sphi 0, %s196
      %s200 = sphi 0, %s199
      %s216 = sphi 0, %s200
      %s220 = sphi 0, %s220
      %s222 = sphi 0, %s220
      %s223 = sphi 0, %s222
      %s237 = sphi 0, %s223
      %s241 = sphi 0, %s241
      %s243 = sphi 0, %s241
      %s244 = sphi 0, %s243
      %s258 = sphi 0, %s244
      %s264 = sphi 0, %s266
      %s267 = sphi 0, %s264
      %s268 = sphi 0, %s267
      %s284 = sphi 0, %s268
    $region4: #{tpu_custom_call.1} parent=1 // loop_header_branch
      %21 = sbr.rel (%p19) target = $region8
    $region5: #{tpu_custom_call.1} parent=1 // loop_body
      %s23 = ssub.s32 %s18, 1
      %s24 = ssub.s32 %s18, 2
      %s31 = sadd.s32 1, %s26
      %p32 = scmp.ge.s32.totalorder %s31, 1
      %s33 = scalar_select %p32, 0, %s31
      %s34 = sadd.s32 1, %s25
      %s35 = scalar_select %p32, %s34, %s25
      %p36 = scmp.ge.s32.totalorder %s35, 2
      %s37 = scalar_select %p36, 0, %s35
      %s38 = sadd.s32 %s25, %s26
      %s39 = sadd.s32 %s37, %s33
      %s40 = ssub.s32 %s38, %s39
      %p41 = scmp.eq.s32.totalorder %s40, 0
      %s43 = sadd.s32 %s42, 1
      %s44 = scalar_select %p41, %s42, %s43
      %p47 = pneg %p41
      %p48 = scmp.eq.s32.totalorder %s18, 1
      %p49 = por %p47, %p48
      %p50 = scmp.ne.s32.totalorder %s42, %s45
      %p51 = scmp.eq.s32.totalorder %s18, 0
      %p52 = por %p50, %p51
      %p53 = scmp.ne.s32.totalorder %s42, %s45
      %p54 = scmp.eq.s32.totalorder %s23, 1
      %p55 = por %p53, %p54
      %p56 = scmp.ne.s32.totalorder %s45, %s46
      %p57 = scmp.eq.s32.totalorder %s23, 0
      %p58 = por %p56, %p57
      %p59 = scmp.ne.s32.totalorder %s45, %s46
      %p60 = scmp.eq.s32.totalorder %s24, 1
      %p61 = por %p59, %p60
      %p63 = scmp.ne.s32.totalorder %s46, %s62
      %p64 = scmp.eq.s32.totalorder %s24, 0
      %p65 = por %p63, %p64
      %s66 = sadd.s32 %s25, %s26
      %s67 = sadd.s32 %s37, %s33
      %s68 = ssub.s32 %s66, %s67
      %p69 = scmp.eq.s32.totalorder %s68, 0
      %s71 = sadd.s32 %s70, 1
      %s72 = scalar_select %p69, %s70, %s71
      %p75 = pneg %p69
      %p76 = scmp.eq.s32.totalorder %s18, 1
      %p77 = por %p75, %p76
      %p78 = scmp.ne.s32.totalorder %s70, %s73
      %p79 = scmp.eq.s32.totalorder %s18, 0
      %p80 = por %p78, %p79
      %p81 = scmp.ne.s32.totalorder %s70, %s73
      %p82 = scmp.eq.s32.totalorder %s23, 1
      %p83 = por %p81, %p82
      %p84 = scmp.ne.s32.totalorder %s73, %s74
      %p85 = scmp.eq.s32.totalorder %s23, 0
      %p86 = por %p84, %p85
      %p87 = scmp.ne.s32.totalorder %s73, %s74
      %p88 = scmp.eq.s32.totalorder %s24, 1
      %p89 = por %p87, %p88
      %p91 = scmp.ne.s32.totalorder %s74, %s90
      %p92 = scmp.eq.s32.totalorder %s24, 0
      %p93 = por %p91, %p92
      %s94 = sadd.s32 %s25, %s26
      %s95 = sadd.s32 %s37, %s33
      %s96 = ssub.s32 %s94, %s95
      %p97 = scmp.eq.s32.totalorder %s96, 0
      %s99 = sadd.s32 %s98, 1
      %s100 = scalar_select %p97, %s98, %s99
      %p103 = pneg %p97
      %p104 = scmp.eq.s32.totalorder %s18, 1
      %p105 = por %p103, %p104
      %p106 = scmp.ne.s32.totalorder %s98, %s101
      %p107 = scmp.eq.s32.totalorder %s18, 0
      %p108 = por %p106, %p107
      %p109 = scmp.ne.s32.totalorder %s98, %s101
      %p110 = scmp.eq.s32.totalorder %s23, 1
      %p111 = por %p109, %p110
      %p112 = scmp.ne.s32.totalorder %s101, %s102
      %p113 = scmp.eq.s32.totalorder %s23, 0
      %p114 = por %p112, %p113
      %p115 = scmp.ne.s32.totalorder %s101, %s102
      %p116 = scmp.eq.s32.totalorder %s24, 1
      %p117 = por %p115, %p116
      %p119 = scmp.ne.s32.totalorder %s102, %s118
      %p120 = scmp.eq.s32.totalorder %s24, 0
      %p121 = por %p119, %p120
      %s123 = sadd.s32 %s122, 1
      %p126 = scmp.eq.s32.totalorder %s18, 1
      %p127 = scmp.ne.s32.totalorder %s122, %s124
      %p128 = scmp.eq.s32.totalorder %s18, 0
      %p129 = por %p127, %p128
      %p130 = scmp.ne.s32.totalorder %s122, %s124
      %p131 = scmp.eq.s32.totalorder %s23, 1
      %p132 = por %p130, %p131
      %p133 = scmp.ne.s32.totalorder %s124, %s125
      %p134 = scmp.eq.s32.totalorder %s23, 0
      %p135 = por %p133, %p134
      %p136 = scmp.ne.s32.totalorder %s124, %s125
      %p137 = scmp.eq.s32.totalorder %s24, 1
      %p138 = por %p136, %p137
      %p140 = scmp.ne.s32.totalorder %s125, %s139
      %p141 = scmp.eq.s32.totalorder %s24, 0
      %p142 = por %p140, %p141
      %s144 = sadd.s32 %s143, 1
      %p147 = scmp.eq.s32.totalorder %s18, 1
      %p148 = scmp.ne.s32.totalorder %s143, %s145
      %p149 = scmp.eq.s32.totalorder %s18, 0
      %p150 = por %p148, %p149
      %p151 = scmp.ne.s32.totalorder %s143, %s145
      %p152 = scmp.eq.s32.totalorder %s23, 1
      %p153 = por %p151, %p152
      %p154 = scmp.ne.s32.totalorder %s145, %s146
      %p155 = scmp.eq.s32.totalorder %s23, 0
      %p156 = por %p154, %p155
      %p157 = scmp.ne.s32.totalorder %s145, %s146
      %p158 = scmp.eq.s32.totalorder %s24, 1
      %p159 = por %p157, %p158
      %p161 = scmp.ne.s32.totalorder %s146, %s160
      %p162 = scmp.eq.s32.totalorder %s24, 0
      %p163 = por %p161, %p162
      %s164 = sadd.s32 %s25, %s26
      %s165 = sadd.s32 %s37, %s33
      %s166 = ssub.s32 %s164, %s165
      %p167 = scmp.eq.s32.totalorder %s166, 0
      %s169 = sadd.s32 %s168, 1
      %s170 = scalar_select %p167, %s168, %s169
      %p173 = pneg %p167
      %p174 = scmp.eq.s32.totalorder %s18, 1
      %p175 = por %p173, %p174
      %p176 = scmp.ne.s32.totalorder %s168, %s171
      %p177 = scmp.eq.s32.totalorder %s18, 0
      %p178 = por %p176, %p177
      %p179 = scmp.ne.s32.totalorder %s168, %s171
      %p180 = scmp.eq.s32.totalorder %s23, 1
      %p181 = por %p179, %p180
      %p182 = scmp.ne.s32.totalorder %s171, %s172
      %p183 = scmp.eq.s32.totalorder %s23, 0
      %p184 = por %p182, %p183
      %p185 = scmp.ne.s32.totalorder %s171, %s172
      %p186 = scmp.eq.s32.totalorder %s24, 1
      %p187 = por %p185, %p186
      %p189 = scmp.ne.s32.totalorder %s172, %s188
      %p190 = scmp.eq.s32.totalorder %s24, 0
      %p191 = por %p189, %p190
      %s192 = sadd.s32 %s25, %s26
      %s193 = sadd.s32 %s37, %s33
      %s194 = ssub.s32 %s192, %s193
      %p195 = scmp.eq.s32.totalorder %s194, 0
      %s197 = sadd.s32 %s196, 1
      %s198 = scalar_select %p195, %s196, %s197
      %p201 = pneg %p195
      %p202 = scmp.eq.s32.totalorder %s18, 1
      %p203 = por %p201, %p202
      %p204 = scmp.ne.s32.totalorder %s196, %s199
      %p205 = scmp.eq.s32.totalorder %s18, 0
      %p206 = por %p204, %p205
      %p207 = scmp.ne.s32.totalorder %s196, %s199
      %p208 = scmp.eq.s32.totalorder %s23, 1
      %p209 = por %p207, %p208
      %p210 = scmp.ne.s32.totalorder %s199, %s200
      %p211 = scmp.eq.s32.totalorder %s23, 0
      %p212 = por %p210, %p211
      %p213 = scmp.ne.s32.totalorder %s199, %s200
      %p214 = scmp.eq.s32.totalorder %s24, 1
      %p215 = por %p213, %p214
      %p217 = scmp.ne.s32.totalorder %s200, %s216
      %p218 = scmp.eq.s32.totalorder %s24, 0
      %p219 = por %p217, %p218
      %s221 = sadd.s32 %s220, 1
      %p224 = scmp.eq.s32.totalorder %s18, 1
      %p225 = scmp.ne.s32.totalorder %s220, %s222
      %p226 = scmp.eq.s32.totalorder %s18, 0
      %p227 = por %p225, %p226
      %p228 = scmp.ne.s32.totalorder %s220, %s222
      %p229 = scmp.eq.s32.totalorder %s23, 1
      %p230 = por %p228, %p229
      %p231 = scmp.ne.s32.totalorder %s222, %s223
      %p232 = scmp.eq.s32.totalorder %s23, 0
      %p233 = por %p231, %p232
      %p234 = scmp.ne.s32.totalorder %s222, %s223
      %p235 = scmp.eq.s32.totalorder %s24, 1
      %p236 = por %p234, %p235
      %p238 = scmp.ne.s32.totalorder %s223, %s237
      %p239 = scmp.eq.s32.totalorder %s24, 0
      %p240 = por %p238, %p239
      %s242 = sadd.s32 %s241, 1
      %p245 = scmp.eq.s32.totalorder %s18, 1
      %p246 = scmp.ne.s32.totalorder %s241, %s243
      %p247 = scmp.eq.s32.totalorder %s18, 0
      %p248 = por %p246, %p247
      %p249 = scmp.ne.s32.totalorder %s241, %s243
      %p250 = scmp.eq.s32.totalorder %s23, 1
      %p251 = por %p249, %p250
      %p252 = scmp.ne.s32.totalorder %s243, %s244
      %p253 = scmp.eq.s32.totalorder %s23, 0
      %p254 = por %p252, %p253
      %p255 = scmp.ne.s32.totalorder %s243, %s244
      %p256 = scmp.eq.s32.totalorder %s24, 1
      %p257 = por %p255, %p256
      %p259 = scmp.ne.s32.totalorder %s244, %s258
      %p260 = scmp.eq.s32.totalorder %s24, 0
      %p261 = por %p259, %p260
      %s262 = ssub.s32 %s25, %s37
      %p263 = scmp.eq.s32.totalorder %s262, 0
      %s265 = sadd.s32 %s264, 1
      %s266 = scalar_select %p263, %s264, %s265
      %p269 = pneg %p263
      %p270 = scmp.eq.s32.totalorder %s18, 1
      %p271 = por %p269, %p270
      %p272 = scmp.ne.s32.totalorder %s264, %s267
      %p273 = scmp.eq.s32.totalorder %s18, 0
      %p274 = por %p272, %p273
      %p275 = scmp.ne.s32.totalorder %s264, %s267
      %p276 = scmp.eq.s32.totalorder %s23, 1
      %p277 = por %p275, %p276
      %p278 = scmp.ne.s32.totalorder %s267, %s268
      %p279 = scmp.eq.s32.totalorder %s23, 0
      %p280 = por %p278, %p279
      %p281 = scmp.ne.s32.totalorder %s267, %s268
      %p282 = scmp.eq.s32.totalorder %s24, 1
      %p283 = por %p281, %p282
      %p285 = scmp.ne.s32.totalorder %s268, %s284
      %p286 = scmp.eq.s32.totalorder %s24, 0
      %p287 = por %p285, %p286
      %p288 = scmp.le.s32.totalorder 1, %s18
      %p289 = scmp.lt.s32.totalorder %s18, 3
      %p290 = pnand %p288, %p289
      %p291 = pneg %p290
      // Predicated region
      $region9: #{tpu_custom_call.1} parent=5 // pred_check
        _
      $region10: #{tpu_custom_call.1} parent=5 // pred_check_branch
        %293 = sbr.rel (%p290) target = $region12
      $region11: #{tpu_custom_call.1} parent=5 // pred_region
        %s294 = ssub.s32 %s18, 1
        // Predicated region
        $region13: #{tpu_custom_call.1} parent=11 // pred_check
          %p295 = pneg %p135
        $region14: #{tpu_custom_call.1} parent=11 // pred_check_branch
          %297 = sbr.rel (%p295) target = $region16
        $region15: #{tpu_custom_call.1} parent=11 // pred_region
          _
        $region16: #{tpu_custom_call.1} parent=11 // pred_fallthru
          _
        // Predicated region
        $region17: #{tpu_custom_call.1} parent=11 // pred_check
          %p298 = pneg %p156
        $region18: #{tpu_custom_call.1} parent=11 // pred_check_branch
          %300 = sbr.rel (%p298) target = $region20
        $region19: #{tpu_custom_call.1} parent=11 // pred_region
          _
        $region20: #{tpu_custom_call.1} parent=11 // pred_fallthru
          _
        // Predicated region
        $region21: #{tpu_custom_call.1} parent=11 // pred_check
          %p301 = pneg %p233
        $region22: #{tpu_custom_call.1} parent=11 // pred_check_branch
          %303 = sbr.rel (%p301) target = $region24
        $region23: #{tpu_custom_call.1} parent=11 // pred_region
          _
        $region24: #{tpu_custom_call.1} parent=11 // pred_fallthru
          _
        // Predicated region
        $region25: #{tpu_custom_call.1} parent=11 // pred_check
          %p304 = pneg %p254
        $region26: #{tpu_custom_call.1} parent=11 // pred_check_branch
          %306 = sbr.rel (%p304) target = $region28
        $region27: #{tpu_custom_call.1} parent=11 // pred_region
          _
        $region28: #{tpu_custom_call.1} parent=11 // pred_fallthru
          _
      $region12: #{tpu_custom_call.1} parent=5 // pred_fallthru
        _
      %p307 = scmp.lt.s32.totalorder %s18, 2
      // Predicated region
      $region29: #{tpu_custom_call.1} parent=5 // pred_check
        %p308 = pneg %p307
      $region30: #{tpu_custom_call.1} parent=5 // pred_check_branch
        %310 = sbr.rel (%p308) target = $region32
      $region31: #{tpu_custom_call.1} parent=5 // pred_region
        // Predicated region
        $region33: #{tpu_custom_call.1} parent=31 // pred_check
          %p311 = pneg %p52
        $region34: #{tpu_custom_call.1} parent=31 // pred_check_branch
          %313 = sbr.rel (%p311) target = $region36
        $region35: #{tpu_custom_call.1} parent=31 // pred_region
          %s314 = sadd.s32 %s25, %s26
          %p315 = scmp.lt.s32.totalorder %s314, 1
          %s316 = scalar_select %p315, %s314, 1
          %s317 = smul.addr %s316, 4
          %s318 = scalar_lea.vmem %s0, %s317
          %s319 = sadd.s32 %s25, %s26
        $region36: #{tpu_custom_call.1} parent=31 // pred_fallthru
          _
        // Predicated region
        $region37: #{tpu_custom_call.1} parent=31 // pred_check
          %p320 = pneg %p80
        $region38: #{tpu_custom_call.1} parent=31 // pred_check_branch
          %322 = sbr.rel (%p320) target = $region40
        $region39: #{tpu_custom_call.1} parent=31 // pred_region
          %s323 = sadd.s32 %s25, %s26
          %p324 = scmp.lt.s32.totalorder %s323, 1
          %s325 = scalar_select %p324, %s323, 1
          %s326 = smul.addr %s325, 4
          %s327 = scalar_lea.vmem %s1, %s326
          %s328 = sadd.s32 %s25, %s26
        $region40: #{tpu_custom_call.1} parent=31 // pred_fallthru
          _
        // Predicated region
        $region41: #{tpu_custom_call.1} parent=31 // pred_check
          %p329 = pneg %p108
        $region42: #{tpu_custom_call.1} parent=31 // pred_check_branch
          %331 = sbr.rel (%p329) target = $region44
        $region43: #{tpu_custom_call.1} parent=31 // pred_region
          %s332 = sadd.s32 %s25, %s26
          %p333 = scmp.lt.s32.totalorder %s332, 1
          %s334 = scalar_select %p333, %s332, 1
          %s335 = smul.addr %s334, 4
          %s336 = scalar_lea.vmem %s2, %s335
          %s337 = sadd.s32 %s25, %s26
        $region44: #{tpu_custom_call.1} parent=31 // pred_fallthru
          _
        // Predicated region
        $region45: #{tpu_custom_call.1} parent=31 // pred_check
          %p338 = pneg %p178
        $region46: #{tpu_custom_call.1} parent=31 // pred_check_branch
          %340 = sbr.rel (%p338) target = $region48
        $region47: #{tpu_custom_call.1} parent=31 // pred_region
          %s341 = sadd.s32 %s25, %s26
          %p342 = scmp.lt.s32.totalorder %s341, 1
          %s343 = scalar_select %p342, %s341, 1
          %s344 = smul.addr %s343, 2
          %s345 = smul.addr %s344, 8
          %s346 = scalar_lea.vmem %s5, %s345
          %s347 = sadd.s32 %s25, %s26
        $region48: #{tpu_custom_call.1} parent=31 // pred_fallthru
          _
        // Predicated region
        $region49: #{tpu_custom_call.1} parent=31 // pred_check
          %p348 = pneg %p206
        $region50: #{tpu_custom_call.1} parent=31 // pred_check_branch
          %350 = sbr.rel (%p348) target = $region52
        $region51: #{tpu_custom_call.1} parent=31 // pred_region
          %s351 = sadd.s32 %s25, %s26
          %p352 = scmp.lt.s32.totalorder %s351, 1
          %s353 = scalar_select %p352, %s351, 1
          %s354 = smul.addr %s353, 2
          %s355 = smul.addr %s354, 8
          %s356 = scalar_lea.vmem %s6, %s355
          %s357 = sadd.s32 %s25, %s26
        $region52: #{tpu_custom_call.1} parent=31 // pred_fallthru
          _
      $region32: #{tpu_custom_call.1} parent=5 // pred_fallthru
        _
      %p358 = scmp.le.s32.totalorder 1, %s18
      %p359 = scmp.lt.s32.totalorder %s18, 3
      %p360 = pnand %p358, %p359
      %p361 = pneg %p360
      // Predicated region
      $region53: #{tpu_custom_call.1} parent=5 // pred_check
        _
      $region54: #{tpu_custom_call.1} parent=5 // pred_check_branch
        %363 = sbr.rel (%p360) target = $region56
      $region55: #{tpu_custom_call.1} parent=5 // pred_region
        %s364 = ssub.s32 %s18, 1
        %s365 = sadd.s32 %s27, %s28
        %p366 = scmp.lt.s32.totalorder %s365, 1
        %s367 = scalar_select %p366, %s365, 1
        %s368 = smul.addr %s367, 4
        %s369 = scalar_lea.vmem %s0, %s368
        %p370 = pneg %p58
        %p371 = pneg %p55
        %s372 = sadd.s32 %s27, %s28
        %p373 = scmp.lt.s32.totalorder %s372, 1
        %s374 = scalar_select %p373, %s372, 1
        %s375 = smul.addr %s374, 4
        %s376 = scalar_lea.vmem %s1, %s375
        %p377 = pneg %p86
        %p378 = pneg %p83
        %s379 = sadd.s32 %s27, %s28
        %p380 = scmp.lt.s32.totalorder %s379, 1
        %s381 = scalar_select %p380, %s379, 1
        %s382 = smul.addr %s381, 4
        %s383 = scalar_lea.vmem %s2, %s382
        %p384 = pneg %p114
        %p385 = pneg %p111
        %p386 = pneg %p135
        %p387 = pneg %p132
        %p388 = pneg %p156
        %p389 = pneg %p153
        %s390 = sadd.s32 %s27, %s28
        %p391 = scmp.lt.s32.totalorder %s390, 1
        %s392 = scalar_select %p391, %s390, 1
        %s393 = smul.addr %s392, 2
        %s394 = smul.addr %s393, 8
        %s395 = scalar_lea.vmem %s5, %s394
        %p396 = pneg %p184
        %p397 = pneg %p181
        %s398 = sadd.s32 %s27, %s28
        %p399 = scmp.lt.s32.totalorder %s398, 1
        %s400 = scalar_select %p399, %s398, 1
        %s401 = smul.addr %s400, 2
        %s402 = smul.addr %s401, 8
        %s403 = scalar_lea.vmem %s6, %s402
        %p404 = pneg %p212
        %p405 = pneg %p209
        %p406 = pneg %p233
        %p407 = pneg %p230
        %p408 = pneg %p254
        %p409 = pneg %p251
        %p410 = pneg %p280
        %p411 = pneg %p277
        %s412 = sand.u32 %s267, 1
        %s413 = scalar_lea.sflag [#allocation7], %s412
        %s414 = sand.u32 %s267, 1
        %s415 = smul.addr %s414, 8
        %s416 = scalar_lea.vmem [#allocation6], %s415
        %s417 = sadd.s32 %s27, %s28
        %p418 = scmp.lt.s32.totalorder %s417, 1
        %s419 = scalar_select %p418, %s417, 1
        %s420 = smul.addr %s419, 4
        %s421 = scalar_lea.vmem %s0, %s420
        %s422 = sadd.s32 %s27, %s28
        %s423 = sadd.s32 %s27, %s28
        %p424 = scmp.lt.s32.totalorder %s423, 1
        %s425 = scalar_select %p424, %s423, 1
        %s426 = smul.addr %s425, 4
        %s427 = scalar_lea.vmem %s1, %s426
        %s428 = sadd.s32 %s27, %s28
        %s429 = sadd.s32 %s27, %s28
        %p430 = scmp.lt.s32.totalorder %s429, 1
        %s431 = scalar_select %p430, %s429, 1
        %s432 = smul.addr %s431, 4
        %s433 = scalar_lea.vmem %s2, %s432
        %s434 = sadd.s32 %s27, %s28
        %s435 = sadd.s32 %s27, %s28
        %p436 = scmp.lt.s32.totalorder %s435, 1
        %s437 = scalar_select %p436, %s435, 1
        %s438 = smul.addr %s437, 2
        %s439 = smul.addr %s438, 8
        %s440 = scalar_lea.vmem %s5, %s439
        %s441 = sadd.s32 %s27, %s28
        %s442 = sadd.s32 %s27, %s28
        %p443 = scmp.lt.s32.totalorder %s442, 1
        %s444 = scalar_select %p443, %s442, 1
        %s445 = smul.addr %s444, 2
        %s446 = smul.addr %s445, 8
        %s447 = scalar_lea.vmem %s6, %s446
        %s448 = sadd.s32 %s27, %s28
        %p449 = scmp.eq.s32.totalorder %s28, 0
        // Predicated region
        $region57: #{tpu_custom_call.1} parent=55 // pred_check
          %p450 = pneg %p449
        $region58: #{tpu_custom_call.1} parent=55 // pred_check_branch
          %452 = sbr.rel (%p450) target = $region60
        $region59: #{tpu_custom_call.1} parent=55 // pred_region
          %vm453 = vcmask 125952
          %454 = vst.msk [vmem:[#allocation2] sm:$0xf] %vm453, 0.0
          %vm455 = vcmask 64512
          %456 = vst.msk [vmem:[#allocation3] sm:$0xff] %vm455, 0.0
          %457 = vst.msk [vmem:[#allocation3 + $0x8] sm:$0xff] %vm455, 0.0
          %vm458 = vcmask 122880
          %459 = vst.msk [vmem:[#allocation4] sm:$0x1] %vm458, 0.0
          %vm460 = vcmask 253952
          %461 = vst.msk [vmem:[#allocation5] sm:$0x1] %vm460, 0.0
        $region60: #{tpu_custom_call.1} parent=55 // pred_fallthru
          _
        %v462 = vld [vmem:[%s421] sm:$0xf]
        %v463 = vld [vmem:[%s427] sm:$0xf]
        %v464 = vld [vmem:[%s433] sm:$0xf]
        %v465 = vsub.f32 %v462, %v464
        %v466 = vsub.f32 %v463, %v464
        %v467 = vld [vmem:[#allocation2] sm:$0xf]
        %v468 = vmul.f32 %v465, %v465
        %v469 = vmul.f32 %v466, %v466
        %v470 = vadd.f32 %v468, %v469
        %v471 = vadd.f32 %v470, 0.0
        %v472 = vadd.f32 %v467, %v471
        %vm473 = vcmask 125952
        %474 = vst.msk [vmem:[#allocation2] sm:$0xf] %vm473, %v472
        %v475 = vld [vmem:[%s447] sm:$0xff]
        %v476 = vld [vmem:[%s447 + $0x8] sm:$0xff]
        %v477 = vld [vmem:[%s440] sm:$0xff]
        %v478 = vld [vmem:[%s440 + $0x8] sm:$0xff]
        %v479 = vmul.f32 %v477, %v475
        %v480 = vmul.f32 %v478, %v476
        %v481 = vand.u32 2147483647, %v479
        %v482 = vand.u32 2147483647, %v480
        %v483 = vld [vmem:[#allocation3] sm:$0xff]
        %v484 = vld [vmem:[#allocation3 + $0x8] sm:$0xff]
        %v485 = vadd.f32 %v481, 0.0
        %v486 = vadd.f32 %v482, 0.0
        %v487 = vadd.f32 %v483, %v485
        %v488 = vadd.f32 %v484, %v486
        %vm489 = vcmask 64512
        %490 = vst.msk [vmem:[#allocation3] sm:$0xff] %vm489, %v487
        %491 = vst.msk [vmem:[#allocation3 + $0x8] sm:$0xff] %vm489, %v488
        %p492 = scmp.eq.s32.totalorder %s27, 0
        %p493 = pnand %p492, %p449
        %p494 = pneg %p493
        // Predicated region
        $region61: #{tpu_custom_call.1} parent=55 // pred_check
          _
        $region62: #{tpu_custom_call.1} parent=55 // pred_check_branch
          %496 = sbr.rel (%p493) target = $region64
        $region63: #{tpu_custom_call.1} parent=55 // pred_region
          %v497 = vld [vmem:[%s3] sm:$0x3]
          %v498 = vld [vmem:[%s4] sm:$0x3]
          %v499 = vmax.f32 %v497, 0.0
          %v500 = vmul.f32 %v497, %v498
          %v501 = vsub.f32 %v499, %v500
          %v502 = vand.u32 2147483647, %v497
          %v503 = vsub.f32 0.0, %v502
          %v504 = vmul.f32 %v503, 1.442695
          %v505 = vpow.pop %v504
          %v506 = vadd.f32 %v505, 1.0
          %v507 = vlog2.pop %v506
          %v508 = vmul.f32 %v507, 0.6931472
          %v509 = vmul.f32 -0.5, %v505
          %v510 = vadd.f32 %v509, 1.0
          %v511 = vmul.f32 %v510, %v505
          %v512 = vand.u32 2147483647, %v505
          %vm513 = vcmp.lt.f32.partialorder %v512, 0.0004427343
          %v514 = vsel %vm513, %v511, %v508
          %v515 = vadd.f32 %v501, %v514
          %vm516 = vcmask 123904
          %v517 = vsel %vm516, %v515, 0.0
          %v518 = vrot.slane %v517, 4
          %v519 = vadd.f32 %v517, %v518
          %v520 = vrot.slane %v519, 2
          %v521 = vadd.f32 %v519, %v520
          %v522 = vrot.slane %v521, 1
          %v523 = vadd.f32 %v521, %v522
          %vm524 = vcmask 122880
          %525 = vst.msk [vmem:[#allocation4] sm:$0x1] %vm524, %v523
          %v526 = vld [vmem:[%s7] sm:$0x3]
          %v527 = vld [vmem:[%s8] sm:$0x3]
          %v528 = vsub.f32 %v526, %v527
          %v529 = vand.u32 2147483647, %v528
          %vm530 = vcmask 254976
          %v531 = vsel %vm530, %v529, 0.0
          %v532 = vrot.slane %v531, 4
          %v533 = vadd.f32 %v531, %v532
          %v534 = vrot.slane %v533, 2
          %v535 = vadd.f32 %v533, %v534
          %v536 = vrot.slane %v535, 1
          %v537 = vadd.f32 %v535, %v536
          %vm538 = vcmask 253952
          %539 = vst.msk [vmem:[#allocation5] sm:$0x1] %vm538, %v537
        $region64: #{tpu_custom_call.1} parent=55 // pred_fallthru
          _
        // Predicated region
        $region65: #{tpu_custom_call.1} parent=55 // pred_check
          %p540 = pneg %p449
        $region66: #{tpu_custom_call.1} parent=55 // pred_check_branch
          %542 = sbr.rel (%p540) target = $region68
        $region67: #{tpu_custom_call.1} parent=55 // pred_region
          %v543 = vlaneseq
          %v544 = vand.u32 %v543, 127
          %vm545 = vcmp.eq.s32.totalorder %v544, 0
          %v546 = vld [vmem:[#allocation2] sm:$0xf]
          %v547 = vsel %vm473, %v546, 0.0
          %548 = vadd.xlane.f32.xlu0 %v547
          %v549 = vpop.xlane.xlu0 %548
          %v550 = vrot.slane %v549, 4
          %v551 = vadd.f32 %v549, %v550
          %v552 = vrot.slane %v551, 2
          %v553 = vadd.f32 %v551, %v552
          %v554 = vrot.slane %v553, 1
          %v555 = vadd.f32 %v553, %v554
          %s556 = vtos %v555
          %v557 = vstv %s556
          %v558 = vsel %vm545, %v557, 0.0
          %vm559 = vcmp.eq.s32.totalorder %v544, 1
          %v560 = vld [vmem:[#allocation4] sm:$0x1]
          %vm561 = vcmask 122880
          %v562 = vsel %vm561, %v560, 0.0
          %563 = vadd.xlane.f32.xlu0 %v562
          %v564 = vpop.xlane.xlu0 %563
          %v565 = vrot.slane %v564, 4
          %v566 = vadd.f32 %v564, %v565
          %v567 = vrot.slane %v566, 2
          %v568 = vadd.f32 %v566, %v567
          %v569 = vrot.slane %v568, 1
          %v570 = vadd.f32 %v568, %v569
          %s571 = vtos %v570
          %v572 = vstv %s571
          %v573 = vsel %vm559, %v572, 0.0
          %v574 = vadd.f32 %v558, %v573
          %vm575 = vcmp.eq.s32.totalorder %v544, 2
          %v576 = vld [vmem:[#allocation3] sm:$0xff]
          %v577 = vld [vmem:[#allocation3 + $0x8] sm:$0xff]
          %v578 = vsel %vm489, %v576, 0.0
          %v579 = vsel %vm489, %v577, 0.0
          %v580 = vadd.f32 %v578, %v579
          %581 = vadd.xlane.f32.xlu0 %v580
          %v582 = vpop.xlane.xlu0 %581
          %v583 = vrot.slane %v582, 4
          %v584 = vadd.f32 %v582, %v583
          %v585 = vrot.slane %v584, 2
          %v586 = vadd.f32 %v584, %v585
          %v587 = vrot.slane %v586, 1
          %v588 = vadd.f32 %v586, %v587
          %s589 = vtos %v588
          %v590 = vstv %s589
          %v591 = vsel %vm575, %v590, 0.0
          %v592 = vadd.f32 %v574, %v591
          %vm593 = vcmp.eq.s32.totalorder %v544, 3
          %v594 = vld [vmem:[#allocation5] sm:$0x1]
          %vm595 = vcmask 253952
          %v596 = vsel %vm595, %v594, 0.0
          %597 = vadd.xlane.f32.xlu0 %v596
          %v598 = vpop.xlane.xlu0 %597
          %v599 = vrot.slane %v598, 4
          %v600 = vadd.f32 %v598, %v599
          %v601 = vrot.slane %v600, 2
          %v602 = vadd.f32 %v600, %v601
          %v603 = vrot.slane %v602, 1
          %v604 = vadd.f32 %v602, %v603
          %s605 = vtos %v604
          %v606 = vstv %s605
          %v607 = vsel %vm593, %v606, 0.0
          %v608 = vadd.f32 %v592, %v607
          %609 = vst [vmem:[%s416] sm:$0xff] %v608
        $region68: #{tpu_custom_call.1} parent=55 // pred_fallthru
          _
        %s610 = sand.u32 %s267, 1
        %s611 = scalar_lea.sflag [#allocation7], %s610
        %s612 = sand.u32 %s267, 1
        %s613 = smul.addr %s612, 8
        %s614 = scalar_lea.vmem [#allocation6], %s613
        // Predicated region
        $region69: #{tpu_custom_call.1} parent=55 // pred_check
          %p615 = pneg %p277
        $region70: #{tpu_custom_call.1} parent=55 // pred_check_branch
          %617 = sbr.rel (%p615) target = $region72
        $region71: #{tpu_custom_call.1} parent=55 // pred_region
          %619 = vsyncadd %s611, 0
          %s620 = smul.addr %s27, 8
          %s621 = scalar_lea.hbm %s9, %s620
          %s623 = sshll.u32 %s614, 4
          %s624 = int_to_ptr.vmem [resolvable:$true] %s623
          %s625 = sshll.u32 %s621, 4
          %s626 = int_to_ptr.hbm [resolvable:$true] %s625
          %628 = dma.vmem_to_hbm [thread:$0]  %s624, 128, %s626, %s611
        $region72: #{tpu_custom_call.1} parent=55 // pred_fallthru
          _
      $region56: #{tpu_custom_call.1} parent=5 // pred_fallthru
        _
      %p629 = scmp.le.s32.totalorder 2, %s18
      // Predicated region
      $region73: #{tpu_custom_call.1} parent=5 // pred_check
        %p630 = pneg %p629
      $region74: #{tpu_custom_call.1} parent=5 // pred_check_branch
        %632 = sbr.rel (%p630) target = $region76
      $region75: #{tpu_custom_call.1} parent=5 // pred_region
        %s633 = ssub.s32 %s18, 2
        // Predicated region
        $region77: #{tpu_custom_call.1} parent=75 // pred_check
          %p634 = pneg %p283
        $region78: #{tpu_custom_call.1} parent=75 // pred_check_branch
          %636 = sbr.rel (%p634) target = $region80
        $region79: #{tpu_custom_call.1} parent=75 // pred_region
          %s637 = sand.u32 %s268, 1
          %s638 = scalar_lea.sflag [#allocation7], %s637
          %s639 = sand.u32 %s268, 1
          %s640 = smul.addr %s639, 8
          %s641 = scalar_lea.vmem [#allocation6], %s640
          %643 = dma.done %s638, 128
        $region80: #{tpu_custom_call.1} parent=75 // pred_fallthru
          _
      $region76: #{tpu_custom_call.1} parent=5 // pred_fallthru
        _
    $region6: #{tpu_custom_call.1} parent=1 // loop_footer
      %s22 = sadd.s32 1, %s18
    $region7: #{tpu_custom_call.1} parent=1 // loop_footer_branch
      %17 = sbr.rel target = $region3
    $region8: #{tpu_custom_call.1} parent=1 // loop_exit
      _
    %644 = vsyncpa [#allocation7], 1
    %s645 = scalar_lea.sflag [#allocation7], 1
    %646 = vsyncpa %s645, 1

</llo_original>
